<compile_context>
chip_gen: v7x
topology: tpu7x:2x2x1
jax: 0.10.0
libtpu: 0.0.40
codegen_flags: <defaults>
</compile_context>

<pallas_src>
import functools
import math

import jax
import jax.numpy as jnp
from jax.experimental import pallas as pl
from jax.experimental.pallas import tpu as pltpu


# ----------------------------------------------------------------------------
# Hardware budgets
# ----------------------------------------------------------------------------
def _round_up(x, m):
    return -(-x // m) * m


def _vmem_capacity_bytes():
    try:
        info = pltpu.get_tpu_info()
        cap = int(getattr(info, "vmem_capacity_bytes", 0) or 0)
        if cap > 0:
            return cap
    except Exception:
        pass
    return 64 * 1024 * 1024  # conservative (v7x per-TensorCore figure)


_VMEM_CAP = _vmem_capacity_bytes()
# ~48 MiB on v7x (64 MiB physical), ~96 MiB on v5e/v6e (128 MiB physical);
# leaves headroom for compiler scratch and in-kernel intermediates.
_VMEM_LIMIT = int(_VMEM_CAP * 3 // 4)

_GELU_C = 0.7978845608028654  # sqrt(2/pi)


# ----------------------------------------------------------------------------
# GELU (tanh approximation -> single EUP transcendental).
# TODO(synk): tanh-approx GELU differs from torch's exact erf GELU at ~1e-3.
# ----------------------------------------------------------------------------
def _gelu(x):
    return 0.5 * x * (1.0 + jnp.tanh(_GELU_C * (x + 0.044715 * x * x * x)))


# ----------------------------------------------------------------------------
# ComplexBatchNorm1d math on a flattened [B, N] tile (N = q_len*d_model tile).
# Stats reduce over axis 0 (batch) only; bnw/bnb are pre-tiled per column.
# ----------------------------------------------------------------------------
def _complex_bn_2d(pre_r, pre_i, bnw, bnb, eps):
    mr = jnp.mean(pre_r, axis=0, keepdims=True)
    mi = jnp.mean(pre_i, axis=0, keepdims=True)
    cr = pre_r - mr
    ci = pre_i - mi
    crr = jnp.mean(cr * cr, axis=0, keepdims=True) + eps   # [1, Nt]
    cii = jnp.mean(ci * ci, axis=0, keepdims=True) + eps
    cri = jnp.mean(cr * ci, axis=0, keepdims=True)
    det = crr * cii - cri * cri
    s = jnp.sqrt(det)
    t = jnp.sqrt(cii + crr + 2.0 * s)
    inv_st = pl.reciprocal(s * t, approx=True)              # EUP slot
    rrr = (cii + s) * inv_st
    rii = (crr + s) * inv_st
    rri = -cri * inv_st
    nr = rrr * cr + rri * ci
    ni = rii * ci + rri * cr
    w0 = bnw[0:1, :]
    w1 = bnw[1:2, :]
    w2 = bnw[2:3, :]
    b0 = bnb[0:1, :]
    b1 = bnb[1:2, :]
    yr = w0 * nr + w2 * ni + b0
    yi = w2 * nr + w1 * ni + b1
    return yr, yi


# ----------------------------------------------------------------------------
# Kernel 1: pre = src * (complex_weight + 1)  (i.e. cw-mul + residual), then BN.
# Operates on flattened [B, N] layout (lane-dense stores).
# ----------------------------------------------------------------------------
def _cw_residual_bn_kernel(xr_ref, xi_ref, wr_ref, wi_ref, bnw_ref, bnb_ref,
                           yr_ref, yi_ref, *, eps):
    xr = xr_ref[...]
    xi = xi_ref[...]
    wr = wr_ref[...]                                        # [1, Nt]
    wi = wi_ref[...]
    pre_r = xr * (wr + 1.0) - xi * wi
    pre_i = xr * wi + xi * (wr + 1.0)
    yr, yi = _complex_bn_2d(pre_r, pre_i, bnw_ref[...], bnb_ref[...], eps)
    yr_ref[...] = yr
    yi_ref[...] = yi


# ----------------------------------------------------------------------------
# Kernel 3: BN only (the second residual is fused into the FFN kernel).
# ----------------------------------------------------------------------------
def _bn_kernel(pr_ref, pi_ref, bnw_ref, bnb_ref, yr_ref, yi_ref, *, eps):
    yr, yi = _complex_bn_2d(pr_ref[...], pi_ref[...], bnw_ref[...], bnb_ref[...], eps)
    yr_ref[...] = yr
    yi_ref[...] = yi


def _pick_lane_tile(n_cols, per_col_bytes, budget):
    """Lane tile (multiple of 128) that fits the VMEM budget; prefers >=2 blocks."""
    if n_cols <= 128:
        return n_cols
    cap = (budget // max(per_col_bytes, 1)) // 128 * 128
    cap = max(128, min(cap, 4096))
    two_way = max(128, _round_up(_round_up(n_cols, 2) // 2, 128))   # >=2 blocks (v7x TCs)
    return min(cap, two_way, _round_up(n_cols, 128))


def cw_residual_bn(xr, xi, cw_r, cw_i, bn_w, bn_b, *, eps=1e-5):
    bs, n = xr.shape
    per_col = (4 * bs + 7) * 4 * 2          # 4 x [B,.] f32 blocks + params, double-buffered
    n_t = _pick_lane_tile(n, per_col, _VMEM_LIMIT // 3)
    x_spec = pl.BlockSpec((bs, n_t), lambda j: (0, j))
    r1_spec = pl.BlockSpec((1, n_t), lambda j: (0, j))
    bnw_spec = pl.BlockSpec((3, n_t), lambda j: (0, j))
    bnb_spec = pl.BlockSpec((2, n_t), lambda j: (0, j))
    yr, yi = pl.pallas_call(
        functools.partial(_cw_residual_bn_kernel, eps=eps),
        grid=(pl.cdiv(n, n_t),),
        in_specs=[x_spec, x_spec, r1_spec, r1_spec, bnw_spec, bnb_spec],
        out_specs=[x_spec, x_spec],
        out_shape=[jax.ShapeDtypeStruct((bs, n), jnp.float32)] * 2,
        compiler_params=pltpu.CompilerParams(
            dimension_semantics=("parallel",),
            vmem_limit_bytes=_VMEM_LIMIT),
    )(xr, xi, cw_r, cw_i, bn_w, bn_b)
    return yr, yi


def complex_bn(pr, pi, bn_w, bn_b, *, eps=1e-5):
    bs, n = pr.shape
    per_col = (4 * bs + 5) * 4 * 2
    n_t = _pick_lane_tile(n, per_col, _VMEM_LIMIT // 3)
    x_spec = pl.BlockSpec((bs, n_t), lambda j: (0, j))
    bnw_spec = pl.BlockSpec((3, n_t), lambda j: (0, j))
    bnb_spec = pl.BlockSpec((2, n_t), lambda j: (0, j))
    yr, yi = pl.pallas_call(
        functools.partial(_bn_kernel, eps=eps),
        grid=(pl.cdiv(n, n_t),),
        in_specs=[x_spec, x_spec, bnw_spec, bnb_spec],
        out_specs=[x_spec, x_spec],
        out_shape=[jax.ShapeDtypeStruct((bs, n), jnp.float32)] * 2,
        compiler_params=pltpu.CompilerParams(
            dimension_semantics=("parallel",),
            vmem_limit_bytes=_VMEM_LIMIT),
    )(pr, pi, bn_w, bn_b)
    return yr, yi


# ----------------------------------------------------------------------------
# Kernel 2: complex FFN (Gauss 3-matmul complex product, bf16 weights, f32 acc)
# with the second residual fused into the output stores.
#   t1 = xr@Wr, t2 = xi@Wi, t3 = (xr+xi)@(Wr+Wi)  ->  re = t1-t2, im = t3-t1-t2
# ----------------------------------------------------------------------------
def _complex_ffn_kernel(xr_ref, xi_ref,
                        w1r_ref, w1i_ref, w1s_ref, c1r_ref, c1i_ref,
                        w2r_ref, w2i_ref, w2s_ref, c2r_ref, c2i_ref,
                        yr_ref, yi_ref):
    f32 = jnp.float32
    bf16 = jnp.bfloat16
    xr = xr_ref[...]
    xi = xi_ref[...]
    xr_b = xr.astype(bf16)
    xi_b = xi.astype(bf16)
    xs_b = (xr + xi).astype(bf16)
    t1 = jnp.dot(xr_b, w1r_ref[...], preferred_element_type=f32)
    t2 = jnp.dot(xi_b, w1i_ref[...], preferred_element_type=f32)
    t3 = jnp.dot(xs_b, w1s_ref[...], preferred_element_type=f32)
    hr = t1 - t2 + c1r_ref[...]
    hi = t3 - t1 - t2 + c1i_ref[...]
    gr = _gelu(hr)
    gi = _gelu(hi)
    gr_b = gr.astype(bf16)
    gi_b = gi.astype(bf16)
    gs_b = (gr + gi).astype(bf16)
    u1 = jnp.dot(gr_b, w2r_ref[...], preferred_element_type=f32)
    u2 = jnp.dot(gi_b, w2i_ref[...], preferred_element_type=f32)
    u3 = jnp.dot(gs_b, w2s_ref[...], preferred_element_type=f32)
    # Second residual fused here: xr/xi (post-BN1 src) are already in VMEM.
    yr_ref[...] = u1 - u2 + c2r_ref[...] + xr
    yi_ref[...] = u3 - u1 - u2 + c2i_ref[...] + xi


def _pick_row_tile(n_rows, d_model, d_ff, vmem_limit):
    weights_bytes = 6 * d_model * d_ff * 2 * 2           # bf16 weights, double-buffered
    budget = max(vmem_limit - weights_bytes - (4 << 20), 4 << 20)
    # per-row VMEM: (xr,xi,yr,yi) f32 double-buffered + ~8 f32 [., d_ff] temporaries
    per_row = 4 * d_model * 4 * 2 + 8 * d_ff * 4
    rt = max(8, min(512, (budget // max(per_row, 1)) // 8 * 8))
    if n_rows >= 16:                                      # keep >=2 blocks (v7x 2 TCs)
        rt = min(rt, max(8, _round_up(_round_up(n_rows, 2) // 2, 8)))
    return min(rt, _round_up(n_rows, 8))


def complex_ffn_residual(xr, xi,
                         w1r, w1i, w1s, c1r, c1i,
                         w2r, w2i, w2s, c2r, c2i):
    n, d_model = xr.shape
    d_ff = w1r.shape[1]
    row_tile = _pick_row_tile(n, d_model, d_ff, _VMEM_LIMIT)
    # NOTE: pipeline_mode=pl.Buffered(1) on the constant-index weight specs would
    # halve resident weight VMEM on v7x; omitted for portability — the row-tile
    # picker above already budgets for double-buffered weights.
    x_spec = pl.BlockSpec((row_tile, d_model), lambda i: (i, 0))
    w1_spec = pl.BlockSpec((d_model, d_ff), lambda i: (0, 0))
    c1_spec = pl.BlockSpec((1, d_ff), lambda i: (0, 0))
    w2_spec = pl.BlockSpec((d_ff, d_model), lambda i: (0, 0))
    c2_spec = pl.BlockSpec((1, d_model), lambda i: (0, 0))
    y_spec = pl.BlockSpec((row_tile, d_model), lambda i: (i, 0))
    flops = 12 * n * d_model * d_ff                       # 3 matmuls x 2 layers, complex
    transcendentals = 2 * n * d_ff                        # tanh in GELU (re + im)
    bytes_accessed = 16 * n * d_model + 12 * d_model * d_ff + 8 * (d_ff + d_model)
    yr, yi = pl.pallas_call(
        _complex_ffn_kernel,
        grid=(pl.cdiv(n, row_tile),),
        in_specs=[x_spec, x_spec,
                  w1_spec, w1_spec, w1_spec, c1_spec, c1_spec,
                  w2_spec, w2_spec, w2_spec, c2_spec, c2_spec],
        out_specs=[y_spec, y_spec],
        out_shape=[jax.ShapeDtypeStruct((n, d_model), jnp.float32)] * 2,
        compiler_params=pltpu.CompilerParams(
            dimension_semantics=("parallel",),
            vmem_limit_bytes=_VMEM_LIMIT),
        cost_estimate=pl.CostEstimate(flops=int(flops),
                                      transcendentals=int(transcendentals),
                                      bytes_accessed=int(bytes_accessed)),
    )(xr, xi, w1r, w1i, w1s, c1r, c1i, w2r, w2i, w2s, c2r, c2i)
    return yr, yi


# ----------------------------------------------------------------------------
# Full layer / encoder forward (pre_norm=False, all dropouts p=0).
# ----------------------------------------------------------------------------
def tst_encoder_layer_forward(xr, xi, p, *, eps=1e-5):
    bs, q_len, d_model = xr.shape
    n_flat = q_len * d_model
    # Lane-dense flattened view for the two BN passes (layout-only reshape).
    xr2 = xr.reshape(bs, n_flat)
    xi2 = xi.reshape(bs, n_flat)
    # (1)+(2)+(3): complex-weight mul + residual + BN (fused)
    sr, si = cw_residual_bn(xr2, xi2, p["cw_r"], p["cw_i"],
                            p["bn_w"], p["bn_b"], eps=eps)
    # (4)+(5): complex FFN with second residual fused into the kernel
    fr, fi = complex_ffn_residual(sr.reshape(bs * q_len, d_model),
                                  si.reshape(bs * q_len, d_model),
                                  p["w1r"], p["w1i"], p["w1s"], p["c1r"], p["c1i"],
                                  p["w2r"], p["w2i"], p["w2s"], p["c2r"], p["c2i"])
    # (6): BN only
    yr, yi = complex_bn(fr.reshape(bs, n_flat), fi.reshape(bs, n_flat),
                        p["bn_w"], p["bn_b"], eps=eps)
    return yr.reshape(bs, q_len, d_model), yi.reshape(bs, q_len, d_model)


def tst_encoder_forward(xr, xi, layer_params):
    for p in layer_params:
        xr, xi = tst_encoder_layer_forward(xr, xi, p)
    return xr, xi


# ----------------------------------------------------------------------------
# Deterministic parameter initialization (matches the torch module defaults).
# ----------------------------------------------------------------------------
def _init_linear(key, fan_in, fan_out):
    kw, kb = jax.random.split(key)
    bound = 1.0 / math.sqrt(fan_in)
    w = jax.random.uniform(kw, (fan_out, fan_in), jnp.float32, -bound, bound)
    b = jax.random.uniform(kb, (fan_out,), jnp.float32, -bound, bound)
    return w, b


def init_layer_params(key, q_len, d_model, d_ff):
    k_cw, k1, k1f, k2, k2f = jax.random.split(key, 5)
    cw = jax.random.normal(k_cw, (q_len, d_model, 2), jnp.float32) * 0.02
    w1, b1 = _init_linear(k1, d_model, d_ff)        # Linear1
    w1f, b1f = _init_linear(k1f, d_model, d_ff)     # Linear1_fu
    w2, b2 = _init_linear(k2, d_ff, d_model)        # Linear2
    w2f, b2f = _init_linear(k2f, d_ff, d_model)     # Linear2_fu
    # ComplexBatchNorm1d affine params as in reset_parameters(), pre-tiled so the
    # flattened [B, q_len*d_model] BN layout indexes feature d = column % d_model.
    sqrt2 = 1.4142135623730951
    bn_w = jnp.concatenate([jnp.full((1, d_model), sqrt2, jnp.float32),
                            jnp.full((1, d_model), sqrt2, jnp.float32),
                            jnp.zeros((1, d_model), jnp.float32)], axis=0)   # [3, D]
    bn_b = jnp.zeros((2, d_model), jnp.float32)                              # [2, D]
    bn_w_flat = jnp.tile(bn_w, (1, q_len))                                   # [3, q_len*D]
    bn_b_flat = jnp.tile(bn_b, (1, q_len))                                   # [2, q_len*D]
    # bf16 FFN weights (f32 accumulation in-kernel); Gauss-trick sums precomputed.
    bf16 = jnp.bfloat16
    w1r_t = jnp.asarray(w1.T)    # [d_model, d_ff]
    w1i_t = jnp.asarray(w1f.T)
    w2r_t = jnp.asarray(w2.T)    # [d_ff, d_model]
    w2i_t = jnp.asarray(w2f.T)
    return {
        "cw_r": cw[:, :, 0].reshape(1, q_len * d_model),
        "cw_i": cw[:, :, 1].reshape(1, q_len * d_model),
        "bn_w": bn_w_flat, "bn_b": bn_b_flat,
        "w1r": w1r_t.astype(bf16), "w1i": w1i_t.astype(bf16),
        "w1s": (w1r_t + w1i_t).astype(bf16),
        "c1r": (b1 - b1f)[None, :], "c1i": (b1 + b1f)[None, :],
        "w2r": w2r_t.astype(bf16), "w2i": w2i_t.astype(bf16),
        "w2s": (w2r_t + w2i_t).astype(bf16),
        "c2r": (b2 - b2f)[None, :], "c2i": (b2 + b2f)[None, :],
    }


if __name__ == "__main__":
    # Small shapes consistent with the module (n_heads only feeds an assert).
    bs, q_len, d_model, d_ff, n_layers = 2, 8, 32, 64, 2

    key = jax.random.PRNGKey(0)
    k_params, k_xr, k_xi = jax.random.split(key, 3)
    layer_keys = jax.random.split(k_params, n_layers)
    layer_params = [init_layer_params(k, q_len, d_model, d_ff) for k in layer_keys]
    src_real = jax.random.normal(k_xr, (bs, q_len, d_model), jnp.float32)
    src_imag = jax.random.normal(k_xi, (bs, q_len, d_model), jnp.float32)

    out_real, out_imag = jax.jit(tst_encoder_forward)(src_real, src_imag, layer_params)
    jax.block_until_ready((out_real, out_imag))

    assert out_real.shape == (bs, q_len, d_model)
    assert out_imag.shape == (bs, q_len, d_model)
    assert bool(jnp.all(jnp.isfinite(out_real))) and bool(jnp.all(jnp.isfinite(out_imag)))
    print("KERNEL_OK")
</pallas_src>

<mosaic_0001>
module attributes {stable_mosaic.version = 11 : i64} {
  func.func @_cw_residual_bn_kernel(%arg0: i32, %arg1: memref<2x128xf32, #tpu.memory_space<vmem>>, %arg2: memref<2x128xf32, #tpu.memory_space<vmem>>, %arg3: memref<1x128xf32, #tpu.memory_space<vmem>>, %arg4: memref<1x128xf32, #tpu.memory_space<vmem>>, %arg5: memref<3x128xf32, #tpu.memory_space<vmem>>, %arg6: memref<2x128xf32, #tpu.memory_space<vmem>>, %arg7: memref<2x128xf32, #tpu.memory_space<vmem>>, %arg8: memref<2x128xf32, #tpu.memory_space<vmem>>) attributes {dimension_semantics = [#tpu.dimension_semantics<parallel>], iteration_bounds = array<i64: 2>, scalar_prefetch = 0 : i64, scratch_operands = 0 : i64, tpu.core_type = #tpu.core_type<tc>, window_params = [{transform_indices = @transform_0, window_bounds = array<i64: 2, 128>}, {transform_indices = @transform_1, window_bounds = array<i64: 2, 128>}, {transform_indices = @transform_2, window_bounds = array<i64: 1, 128>}, {transform_indices = @transform_3, window_bounds = array<i64: 1, 128>}, {transform_indices = @transform_4, window_bounds = array<i64: 3, 128>}, {transform_indices = @transform_5, window_bounds = array<i64: 2, 128>}, {transform_indices = @transform_6, window_bounds = array<i64: 2, 128>}, {transform_indices = @transform_7, window_bounds = array<i64: 2, 128>}]} {
    %c0 = arith.constant 0 : index
    %c0_0 = arith.constant 0 : index
    %0 = vector.load %arg1[%c0, %c0_0] : memref<2x128xf32, #tpu.memory_space<vmem>>, vector<2x128xf32>
    %c0_1 = arith.constant 0 : index
    %c0_2 = arith.constant 0 : index
    %1 = vector.load %arg2[%c0_1, %c0_2] : memref<2x128xf32, #tpu.memory_space<vmem>>, vector<2x128xf32>
    %c0_3 = arith.constant 0 : index
    %c0_4 = arith.constant 0 : index
    %2 = vector.load %arg3[%c0_3, %c0_4] : memref<1x128xf32, #tpu.memory_space<vmem>>, vector<1x128xf32>
    %c0_5 = arith.constant 0 : index
    %c0_6 = arith.constant 0 : index
    %3 = vector.load %arg4[%c0_5, %c0_6] : memref<1x128xf32, #tpu.memory_space<vmem>>, vector<1x128xf32>
    %cst = arith.constant 1.000000e+00 : f32
    %4 = vector.broadcast %cst : f32 to vector<1x128xf32>
    %5 = arith.addf %2, %4 : vector<1x128xf32>
    %6 = vector.broadcast %5 : vector<1x128xf32> to vector<2x128xf32>
    %7 = arith.mulf %0, %6 : vector<2x128xf32>
    %8 = vector.broadcast %3 : vector<1x128xf32> to vector<2x128xf32>
    %9 = arith.mulf %1, %8 : vector<2x128xf32>
    %10 = arith.subf %7, %9 : vector<2x128xf32>
    %11 = vector.broadcast %3 : vector<1x128xf32> to vector<2x128xf32>
    %12 = arith.mulf %0, %11 : vector<2x128xf32>
    %cst_7 = arith.constant 1.000000e+00 : f32
    %13 = vector.broadcast %cst_7 : f32 to vector<1x128xf32>
    %14 = arith.addf %2, %13 : vector<1x128xf32>
    %15 = vector.broadcast %14 : vector<1x128xf32> to vector<2x128xf32>
    %16 = arith.mulf %1, %15 : vector<2x128xf32>
    %17 = arith.addf %12, %16 : vector<2x128xf32>
    %c0_8 = arith.constant 0 : index
    %c0_9 = arith.constant 0 : index
    %18 = vector.load %arg5[%c0_8, %c0_9] : memref<3x128xf32, #tpu.memory_space<vmem>>, vector<3x128xf32>
    %c0_10 = arith.constant 0 : index
    %c0_11 = arith.constant 0 : index
    %19 = vector.load %arg6[%c0_10, %c0_11] : memref<2x128xf32, #tpu.memory_space<vmem>>, vector<2x128xf32>
    %cst_12 = arith.constant dense<0.000000e+00> : vector<128xf32>
    %20 = vector.multi_reduction <add>, %10, %cst_12 [0] : vector<2x128xf32> to vector<128xf32>
    %21 = vector.shape_cast %20 : vector<128xf32> to vector<1x128xf32>
    %cst_13 = arith.constant 2.000000e+00 : f32
    %22 = vector.broadcast %cst_13 : f32 to vector<1x128xf32>
    %23 = arith.divf %21, %22 : vector<1x128xf32>
    %cst_14 = arith.constant dense<0.000000e+00> : vector<128xf32>
    %24 = vector.multi_reduction <add>, %17, %cst_14 [0] : vector<2x128xf32> to vector<128xf32>
    %25 = vector.shape_cast %24 : vector<128xf32> to vector<1x128xf32>
    %cst_15 = arith.constant 2.000000e+00 : f32
    %26 = vector.broadcast %cst_15 : f32 to vector<1x128xf32>
    %27 = arith.divf %25, %26 : vector<1x128xf32>
    %28 = vector.broadcast %23 : vector<1x128xf32> to vector<2x128xf32>
    %29 = arith.subf %10, %28 : vector<2x128xf32>
    %30 = vector.broadcast %27 : vector<1x128xf32> to vector<2x128xf32>
    %31 = arith.subf %17, %30 : vector<2x128xf32>
    %32 = arith.mulf %29, %29 : vector<2x128xf32>
    %cst_16 = arith.constant dense<0.000000e+00> : vector<128xf32>
    %33 = vector.multi_reduction <add>, %32, %cst_16 [0] : vector<2x128xf32> to vector<128xf32>
    %34 = vector.shape_cast %33 : vector<128xf32> to vector<1x128xf32>
    %cst_17 = arith.constant 2.000000e+00 : f32
    %35 = vector.broadcast %cst_17 : f32 to vector<1x128xf32>
    %36 = arith.divf %34, %35 : vector<1x128xf32>
    %cst_18 = arith.constant 9.99999974E-6 : f32
    %37 = vector.broadcast %cst_18 : f32 to vector<1x128xf32>
    %38 = arith.addf %36, %37 : vector<1x128xf32>
    %39 = arith.mulf %31, %31 : vector<2x128xf32>
    %cst_19 = arith.constant dense<0.000000e+00> : vector<128xf32>
    %40 = vector.multi_reduction <add>, %39, %cst_19 [0] : vector<2x128xf32> to vector<128xf32>
    %41 = vector.shape_cast %40 : vector<128xf32> to vector<1x128xf32>
    %cst_20 = arith.constant 2.000000e+00 : f32
    %42 = vector.broadcast %cst_20 : f32 to vector<1x128xf32>
    %43 = arith.divf %41, %42 : vector<1x128xf32>
    %cst_21 = arith.constant 9.99999974E-6 : f32
    %44 = vector.broadcast %cst_21 : f32 to vector<1x128xf32>
    %45 = arith.addf %43, %44 : vector<1x128xf32>
    %46 = arith.mulf %29, %31 : vector<2x128xf32>
    %cst_22 = arith.constant dense<0.000000e+00> : vector<128xf32>
    %47 = vector.multi_reduction <add>, %46, %cst_22 [0] : vector<2x128xf32> to vector<128xf32>
    %48 = vector.shape_cast %47 : vector<128xf32> to vector<1x128xf32>
    %cst_23 = arith.constant 2.000000e+00 : f32
    %49 = vector.broadcast %cst_23 : f32 to vector<1x128xf32>
    %50 = arith.divf %48, %49 : vector<1x128xf32>
    %51 = arith.mulf %38, %45 : vector<1x128xf32>
    %52 = arith.mulf %50, %50 : vector<1x128xf32>
    %53 = arith.subf %51, %52 : vector<1x128xf32>
    %54 = math.sqrt %53 : vector<1x128xf32>
    %55 = arith.addf %45, %38 : vector<1x128xf32>
    %cst_24 = arith.constant 2.000000e+00 : f32
    %56 = vector.broadcast %cst_24 : f32 to vector<1x128xf32>
    %57 = arith.mulf %56, %54 : vector<1x128xf32>
    %58 = arith.addf %55, %57 : vector<1x128xf32>
    %59 = math.sqrt %58 : vector<1x128xf32>
    %60 = arith.mulf %54, %59 : vector<1x128xf32>
    %61 = tpu.reciprocal %60 {approx = true} : vector<1x128xf32> -> vector<1x128xf32>
    %62 = arith.addf %45, %54 : vector<1x128xf32>
    %63 = arith.mulf %62, %61 : vector<1x128xf32>
    %64 = arith.addf %38, %54 : vector<1x128xf32>
    %65 = arith.mulf %64, %61 : vector<1x128xf32>
    %cst_25 = arith.constant 0.000000e+00 : f32
    %66 = vector.broadcast %cst_25 : f32 to vector<1x128xf32>
    %67 = arith.subf %66, %50 : vector<1x128xf32>
    %68 = arith.mulf %67, %61 : vector<1x128xf32>
    %69 = vector.broadcast %63 : vector<1x128xf32> to vector<2x128xf32>
    %70 = arith.mulf %69, %29 : vector<2x128xf32>
    %71 = vector.broadcast %68 : vector<1x128xf32> to vector<2x128xf32>
    %72 = arith.mulf %71, %31 : vector<2x128xf32>
    %73 = arith.addf %70, %72 : vector<2x128xf32>
    %74 = vector.broadcast %65 : vector<1x128xf32> to vector<2x128xf32>
    %75 = arith.mulf %74, %31 : vector<2x128xf32>
    %76 = vector.broadcast %68 : vector<1x128xf32> to vector<2x128xf32>
    %77 = arith.mulf %76, %29 : vector<2x128xf32>
    %78 = arith.addf %75, %77 : vector<2x128xf32>
    %79 = vector.extract_strided_slice %18 {offsets = [0, 0], sizes = [1, 128], strides = [1, 1]} : vector<3x128xf32> to vector<1x128xf32>
    %80 = vector.extract_strided_slice %18 {offsets = [1, 0], sizes = [1, 128], strides = [1, 1]} : vector<3x128xf32> to vector<1x128xf32>
    %81 = vector.extract_strided_slice %18 {offsets = [2, 0], sizes = [1, 128], strides = [1, 1]} : vector<3x128xf32> to vector<1x128xf32>
    %82 = vector.extract_strided_slice %19 {offsets = [0, 0], sizes = [1, 128], strides = [1, 1]} : vector<2x128xf32> to vector<1x128xf32>
    %83 = vector.extract_strided_slice %19 {offsets = [1, 0], sizes = [1, 128], strides = [1, 1]} : vector<2x128xf32> to vector<1x128xf32>
    %84 = vector.broadcast %79 : vector<1x128xf32> to vector<2x128xf32>
    %85 = arith.mulf %84, %73 : vector<2x128xf32>
    %86 = vector.broadcast %81 : vector<1x128xf32> to vector<2x128xf32>
    %87 = arith.mulf %86, %78 : vector<2x128xf32>
    %88 = arith.addf %85, %87 : vector<2x128xf32>
    %89 = vector.broadcast %82 : vector<1x128xf32> to vector<2x128xf32>
    %90 = arith.addf %88, %89 : vector<2x128xf32>
    %91 = vector.broadcast %81 : vector<1x128xf32> to vector<2x128xf32>
    %92 = arith.mulf %91, %73 : vector<2x128xf32>
    %93 = vector.broadcast %80 : vector<1x128xf32> to vector<2x128xf32>
    %94 = arith.mulf %93, %78 : vector<2x128xf32>
    %95 = arith.addf %92, %94 : vector<2x128xf32>
    %96 = vector.broadcast %83 : vector<1x128xf32> to vector<2x128xf32>
    %97 = arith.addf %95, %96 : vector<2x128xf32>
    %c0_26 = arith.constant 0 : index
    %c0_27 = arith.constant 0 : index
    %98 = vector.load %arg7[%c0_26, %c0_27] : memref<2x128xf32, #tpu.memory_space<vmem>>, vector<2x128xf32>
    tpu.vector_store %arg7[%c0_26, %c0_27], %90 {strides = array<i32>} : memref<2x128xf32, #tpu.memory_space<vmem>>, vector<2x128xf32>,
    %c0_28 = arith.constant 0 : index
    %c0_29 = arith.constant 0 : index
    %99 = vector.load %arg8[%c0_28, %c0_29] : memref<2x128xf32, #tpu.memory_space<vmem>>, vector<2x128xf32>
    tpu.vector_store %arg8[%c0_28, %c0_29], %97 {strides = array<i32>} : memref<2x128xf32, #tpu.memory_space<vmem>>, vector<2x128xf32>,
    return
  }
  func.func @transform_0(%arg0: i32) -> (i32, i32) {
    %c0_i32 = arith.constant 0 : i32
    %c0_i32_0 = arith.constant 0 : i32
    return %c0_i32, %arg0 : i32, i32
  }
  func.func @transform_1(%arg0: i32) -> (i32, i32) {
    %c0_i32 = arith.constant 0 : i32
    %c0_i32_0 = arith.constant 0 : i32
    return %c0_i32, %arg0 : i32, i32
  }
  func.func @transform_2(%arg0: i32) -> (i32, i32) {
    %c0_i32 = arith.constant 0 : i32
    %c0_i32_0 = arith.constant 0 : i32
    return %c0_i32, %arg0 : i32, i32
  }
  func.func @transform_3(%arg0: i32) -> (i32, i32) {
    %c0_i32 = arith.constant 0 : i32
    %c0_i32_0 = arith.constant 0 : i32
    return %c0_i32, %arg0 : i32, i32
  }
  func.func @transform_4(%arg0: i32) -> (i32, i32) {
    %c0_i32 = arith.constant 0 : i32
    %c0_i32_0 = arith.constant 0 : i32
    return %c0_i32, %arg0 : i32, i32
  }
  func.func @transform_5(%arg0: i32) -> (i32, i32) {
    %c0_i32 = arith.constant 0 : i32
    %c0_i32_0 = arith.constant 0 : i32
    return %c0_i32, %arg0 : i32, i32
  }
  func.func @transform_6(%arg0: i32) -> (i32, i32) {
    %c0_i32 = arith.constant 0 : i32
    %c0_i32_0 = arith.constant 0 : i32
    return %c0_i32, %arg0 : i32, i32
  }
  func.func @transform_7(%arg0: i32) -> (i32, i32) {
    %c0_i32 = arith.constant 0 : i32
    %c0_i32_0 = arith.constant 0 : i32
    return %c0_i32, %arg0 : i32, i32
  }
}

module attributes {stable_mosaic.version = 11 : i64} {
  func.func @_complex_ffn_kernel(%arg0: i32, %arg1: memref<8x32xf32, #tpu.memory_space<vmem>>, %arg2: memref<8x32xf32, #tpu.memory_space<vmem>>, %arg3: memref<32x64xbf16, #tpu.memory_space<vmem>>, %arg4: memref<32x64xbf16, #tpu.memory_space<vmem>>, %arg5: memref<32x64xbf16, #tpu.memory_space<vmem>>, %arg6: memref<1x64xf32, #tpu.memory_space<vmem>>, %arg7: memref<1x64xf32, #tpu.memory_space<vmem>>, %arg8: memref<64x32xbf16, #tpu.memory_space<vmem>>, %arg9: memref<64x32xbf16, #tpu.memory_space<vmem>>, %arg10: memref<64x32xbf16, #tpu.memory_space<vmem>>, %arg11: memref<1x32xf32, #tpu.memory_space<vmem>>, %arg12: memref<1x32xf32, #tpu.memory_space<vmem>>, %arg13: memref<8x32xf32, #tpu.memory_space<vmem>>, %arg14: memref<8x32xf32, #tpu.memory_space<vmem>>) attributes {dimension_semantics = [#tpu.dimension_semantics<parallel>], iteration_bounds = array<i64: 2>, scalar_prefetch = 0 : i64, scratch_operands = 0 : i64, tpu.core_type = #tpu.core_type<tc>, window_params = [{transform_indices = @transform_0, window_bounds = array<i64: 8, 32>}, {transform_indices = @transform_1, window_bounds = array<i64: 8, 32>}, {pipeline_mode = #tpu.pipeline_mode<synchronous>, transform_indices = @transform_2, window_bounds = array<i64: 32, 64>}, {pipeline_mode = #tpu.pipeline_mode<synchronous>, transform_indices = @transform_3, window_bounds = array<i64: 32, 64>}, {pipeline_mode = #tpu.pipeline_mode<synchronous>, transform_indices = @transform_4, window_bounds = array<i64: 32, 64>}, {pipeline_mode = #tpu.pipeline_mode<synchronous>, transform_indices = @transform_5, window_bounds = array<i64: 1, 64>}, {pipeline_mode = #tpu.pipeline_mode<synchronous>, transform_indices = @transform_6, window_bounds = array<i64: 1, 64>}, {pipeline_mode = #tpu.pipeline_mode<synchronous>, transform_indices = @transform_7, window_bounds = array<i64: 64, 32>}, {pipeline_mode = #tpu.pipeline_mode<synchronous>, transform_indices = @transform_8, window_bounds = array<i64: 64, 32>}, {pipeline_mode = #tpu.pipeline_mode<synchronous>, transform_indices = @transform_9, window_bounds = array<i64: 64, 32>}, {pipeline_mode = #tpu.pipeline_mode<synchronous>, transform_indices = @transform_10, window_bounds = array<i64: 1, 32>}, {pipeline_mode = #tpu.pipeline_mode<synchronous>, transform_indices = @transform_11, window_bounds = array<i64: 1, 32>}, {transform_indices = @transform_12, window_bounds = array<i64: 8, 32>}, {transform_indices = @transform_13, window_bounds = array<i64: 8, 32>}]} {
    %c0 = arith.constant 0 : index
    %c0_0 = arith.constant 0 : index
    %0 = vector.load %arg1[%c0, %c0_0] : memref<8x32xf32, #tpu.memory_space<vmem>>, vector<8x32xf32>
    %c0_1 = arith.constant 0 : index
    %c0_2 = arith.constant 0 : index
    %1 = vector.load %arg2[%c0_1, %c0_2] : memref<8x32xf32, #tpu.memory_space<vmem>>, vector<8x32xf32>
    %2 = arith.truncf %0 : vector<8x32xf32> to vector<8x32xbf16>
    %3 = arith.truncf %1 : vector<8x32xf32> to vector<8x32xbf16>
    %4 = arith.addf %0, %1 : vector<8x32xf32>
    %5 = arith.truncf %4 : vector<8x32xf32> to vector<8x32xbf16>
    %c0_3 = arith.constant 0 : index
    %c0_4 = arith.constant 0 : index
    %6 = vector.load %arg3[%c0_3, %c0_4] : memref<32x64xbf16, #tpu.memory_space<vmem>>, vector<32x64xbf16>
    %cst = arith.constant dense<0.000000e+00> : vector<8x64xf32>
    %7 = tpu.matmul %2, %6, %cst {dimension_numbers = #tpu.dot_dimension_numbers<[1], [0], [0], [1], [0, 0, 1, 1], [], []>} : vector<8x32xbf16>, vector<32x64xbf16>, vector<8x64xf32> -> vector<8x64xf32>
    %c0_5 = arith.constant 0 : index
    %c0_6 = arith.constant 0 : index
    %8 = vector.load %arg4[%c0_5, %c0_6] : memref<32x64xbf16, #tpu.memory_space<vmem>>, vector<32x64xbf16>
    %cst_7 = arith.constant dense<0.000000e+00> : vector<8x64xf32>
    %9 = tpu.matmul %3, %8, %cst_7 {dimension_numbers = #tpu.dot_dimension_numbers<[1], [0], [0], [1], [0, 0, 1, 1], [], []>} : vector<8x32xbf16>, vector<32x64xbf16>, vector<8x64xf32> -> vector<8x64xf32>
    %c0_8 = arith.constant 0 : index
    %c0_9 = arith.constant 0 : index
    %10 = vector.load %arg5[%c0_8, %c0_9] : memref<32x64xbf16, #tpu.memory_space<vmem>>, vector<32x64xbf16>
    %cst_10 = arith.constant dense<0.000000e+00> : vector<8x64xf32>
    %11 = tpu.matmul %5, %10, %cst_10 {dimension_numbers = #tpu.dot_dimension_numbers<[1], [0], [0], [1], [0, 0, 1, 1], [], []>} : vector<8x32xbf16>, vector<32x64xbf16>, vector<8x64xf32> -> vector<8x64xf32>
    %12 = arith.subf %7, %9 : vector<8x64xf32>
    %c0_11 = arith.constant 0 : index
    %c0_12 = arith.constant 0 : index
    %13 = vector.load %arg6[%c0_11, %c0_12] : memref<1x64xf32, #tpu.memory_space<vmem>>, vector<1x64xf32>
    %14 = vector.broadcast %13 : vector<1x64xf32> to vector<8x64xf32>
    %15 = arith.addf %12, %14 : vector<8x64xf32>
    %16 = arith.subf %11, %7 : vector<8x64xf32>
    %17 = arith.subf %16, %9 : vector<8x64xf32>
    %c0_13 = arith.constant 0 : index
    %c0_14 = arith.constant 0 : index
    %18 = vector.load %arg7[%c0_13, %c0_14] : memref<1x64xf32, #tpu.memory_space<vmem>>, vector<1x64xf32>
    %19 = vector.broadcast %18 : vector<1x64xf32> to vector<8x64xf32>
    %20 = arith.addf %17, %19 : vector<8x64xf32>
    %cst_15 = arith.constant 5.000000e-01 : f32
    %21 = vector.broadcast %cst_15 : f32 to vector<8x64xf32>
    %22 = arith.mulf %21, %15 : vector<8x64xf32>
    %cst_16 = arith.constant 4.471500e-02 : f32
    %23 = vector.broadcast %cst_16 : f32 to vector<8x64xf32>
    %24 = arith.mulf %23, %15 : vector<8x64xf32>
    %25 = arith.mulf %24, %15 : vector<8x64xf32>
    %26 = arith.mulf %25, %15 : vector<8x64xf32>
    %27 = arith.addf %15, %26 : vector<8x64xf32>
    %cst_17 = arith.constant 0.797884583 : f32
    %28 = vector.broadcast %cst_17 : f32 to vector<8x64xf32>
    %29 = arith.mulf %28, %27 : vector<8x64xf32>
    %30 = math.tanh %29 : vector<8x64xf32>
    %cst_18 = arith.constant 1.000000e+00 : f32
    %31 = vector.broadcast %cst_18 : f32 to vector<8x64xf32>
    %32 = arith.addf %31, %30 : vector<8x64xf32>
    %33 = arith.mulf %22, %32 : vector<8x64xf32>
    %cst_19 = arith.constant 5.000000e-01 : f32
    %34 = vector.broadcast %cst_19 : f32 to vector<8x64xf32>
    %35 = arith.mulf %34, %20 : vector<8x64xf32>
    %cst_20 = arith.constant 4.471500e-02 : f32
    %36 = vector.broadcast %cst_20 : f32 to vector<8x64xf32>
    %37 = arith.mulf %36, %20 : vector<8x64xf32>
    %38 = arith.mulf %37, %20 : vector<8x64xf32>
    %39 = arith.mulf %38, %20 : vector<8x64xf32>
    %40 = arith.addf %20, %39 : vector<8x64xf32>
    %cst_21 = arith.constant 0.797884583 : f32
    %41 = vector.broadcast %cst_21 : f32 to vector<8x64xf32>
    %42 = arith.mulf %41, %40 : vector<8x64xf32>
    %43 = math.tanh %42 : vector<8x64xf32>
    %cst_22 = arith.constant 1.000000e+00 : f32
    %44 = vector.broadcast %cst_22 : f32 to vector<8x64xf32>
    %45 = arith.addf %44, %43 : vector<8x64xf32>
    %46 = arith.mulf %35, %45 : vector<8x64xf32>
    %47 = arith.truncf %33 : vector<8x64xf32> to vector<8x64xbf16>
    %48 = arith.truncf %46 : vector<8x64xf32> to vector<8x64xbf16>
    %49 = arith.addf %33, %46 : vector<8x64xf32>
    %50 = arith.truncf %49 : vector<8x64xf32> to vector<8x64xbf16>
    %c0_23 = arith.constant 0 : index
    %c0_24 = arith.constant 0 : index
    %51 = vector.load %arg8[%c0_23, %c0_24] : memref<64x32xbf16, #tpu.memory_space<vmem>>, vector<64x32xbf16>
    %cst_25 = arith.constant dense<0.000000e+00> : vector<8x32xf32>
    %52 = tpu.matmul %47, %51, %cst_25 {dimension_numbers = #tpu.dot_dimension_numbers<[1], [0], [0], [1], [0, 0, 1, 1], [], []>} : vector<8x64xbf16>, vector<64x32xbf16>, vector<8x32xf32> -> vector<8x32xf32>
    %c0_26 = arith.constant 0 : index
    %c0_27 = arith.constant 0 : index
    %53 = vector.load %arg9[%c0_26, %c0_27] : memref<64x32xbf16, #tpu.memory_space<vmem>>, vector<64x32xbf16>
    %cst_28 = arith.constant dense<0.000000e+00> : vector<8x32xf32>
    %54 = tpu.matmul %48, %53, %cst_28 {dimension_numbers = #tpu.dot_dimension_numbers<[1], [0], [0], [1], [0, 0, 1, 1], [], []>} : vector<8x64xbf16>, vector<64x32xbf16>, vector<8x32xf32> -> vector<8x32xf32>
    %c0_29 = arith.constant 0 : index
    %c0_30 = arith.constant 0 : index
    %55 = vector.load %arg10[%c0_29, %c0_30] : memref<64x32xbf16, #tpu.memory_space<vmem>>, vector<64x32xbf16>
    %cst_31 = arith.constant dense<0.000000e+00> : vector<8x32xf32>
    %56 = tpu.matmul %50, %55, %cst_31 {dimension_numbers = #tpu.dot_dimension_numbers<[1], [0], [0], [1], [0, 0, 1, 1], [], []>} : vector<8x64xbf16>, vector<64x32xbf16>, vector<8x32xf32> -> vector<8x32xf32>
    %57 = arith.subf %52, %54 : vector<8x32xf32>
    %c0_32 = arith.constant 0 : index
    %c0_33 = arith.constant 0 : index
    %58 = vector.load %arg11[%c0_32, %c0_33] : memref<1x32xf32, #tpu.memory_space<vmem>>, vector<1x32xf32>
    %59 = vector.broadcast %58 : vector<1x32xf32> to vector<8x32xf32>
    %60 = arith.addf %57, %59 : vector<8x32xf32>
    %61 = arith.addf %60, %0 : vector<8x32xf32>
    %c0_34 = arith.constant 0 : index
    %c0_35 = arith.constant 0 : index
    %62 = vector.load %arg13[%c0_34, %c0_35] : memref<8x32xf32, #tpu.memory_space<vmem>>, vector<8x32xf32>
    tpu.vector_store %arg13[%c0_34, %c0_35], %61 {strides = array<i32>} : memref<8x32xf32, #tpu.memory_space<vmem>>, vector<8x32xf32>,
    %63 = arith.subf %56, %52 : vector<8x32xf32>
    %64 = arith.subf %63, %54 : vector<8x32xf32>
    %c0_36 = arith.constant 0 : index
    %c0_37 = arith.constant 0 : index
    %65 = vector.load %arg12[%c0_36, %c0_37] : memref<1x32xf32, #tpu.memory_space<vmem>>, vector<1x32xf32>
    %66 = vector.broadcast %65 : vector<1x32xf32> to vector<8x32xf32>
    %67 = arith.addf %64, %66 : vector<8x32xf32>
    %68 = arith.addf %67, %1 : vector<8x32xf32>
    %c0_38 = arith.constant 0 : index
    %c0_39 = arith.constant 0 : index
    %69 = vector.load %arg14[%c0_38, %c0_39] : memref<8x32xf32, #tpu.memory_space<vmem>>, vector<8x32xf32>
    tpu.vector_store %arg14[%c0_38, %c0_39], %68 {strides = array<i32>} : memref<8x32xf32, #tpu.memory_space<vmem>>, vector<8x32xf32>,
    return
  }
  func.func @transform_0(%arg0: i32) -> (i32, i32) {
    %c0_i32 = arith.constant 0 : i32
    %c0_i32_0 = arith.constant 0 : i32
    return %arg0, %c0_i32 : i32, i32
  }
  func.func @transform_1(%arg0: i32) -> (i32, i32) {
    %c0_i32 = arith.constant 0 : i32
    %c0_i32_0 = arith.constant 0 : i32
    return %arg0, %c0_i32 : i32, i32
  }
  func.func @transform_2(%arg0: i32) -> (i32, i32) {
    %c0_i32 = arith.constant 0 : i32
    %c0_i32_0 = arith.constant 0 : i32
    %c0_i32_1 = arith.constant 0 : i32
    return %c0_i32, %c0_i32_0 : i32, i32
  }
  func.func @transform_3(%arg0: i32) -> (i32, i32) {
    %c0_i32 = arith.constant 0 : i32
    %c0_i32_0 = arith.constant 0 : i32
    %c0_i32_1 = arith.constant 0 : i32
    return %c0_i32, %c0_i32_0 : i32, i32
  }
  func.func @transform_4(%arg0: i32) -> (i32, i32) {
    %c0_i32 = arith.constant 0 : i32
    %c0_i32_0 = arith.constant 0 : i32
    %c0_i32_1 = arith.constant 0 : i32
    return %c0_i32, %c0_i32_0 : i32, i32
  }
  func.func @transform_5(%arg0: i32) -> (i32, i32) {
    %c0_i32 = arith.constant 0 : i32
    %c0_i32_0 = arith.constant 0 : i32
    %c0_i32_1 = arith.constant 0 : i32
    return %c0_i32, %c0_i32_0 : i32, i32
  }
  func.func @transform_6(%arg0: i32) -> (i32, i32) {
    %c0_i32 = arith.constant 0 : i32
    %c0_i32_0 = arith.constant 0 : i32
    %c0_i32_1 = arith.constant 0 : i32
    return %c0_i32, %c0_i32_0 : i32, i32
  }
  func.func @transform_7(%arg0: i32) -> (i32, i32) {
    %c0_i32 = arith.constant 0 : i32
    %c0_i32_0 = arith.constant 0 : i32
    %c0_i32_1 = arith.constant 0 : i32
    return %c0_i32, %c0_i32_0 : i32, i32
  }
  func.func @transform_8(%arg0: i32) -> (i32, i32) {
    %c0_i32 = arith.constant 0 : i32
    %c0_i32_0 = arith.constant 0 : i32
    %c0_i32_1 = arith.constant 0 : i32
    return %c0_i32, %c0_i32_0 : i32, i32
  }
  func.func @transform_9(%arg0: i32) -> (i32, i32) {
    %c0_i32 = arith.constant 0 : i32
    %c0_i32_0 = arith.constant 0 : i32
    %c0_i32_1 = arith.constant 0 : i32
    return %c0_i32, %c0_i32_0 : i32, i32
  }
  func.func @transform_10(%arg0: i32) -> (i32, i32) {
    %c0_i32 = arith.constant 0 : i32
    %c0_i32_0 = arith.constant 0 : i32
    %c0_i32_1 = arith.constant 0 : i32
    return %c0_i32, %c0_i32_0 : i32, i32
  }
  func.func @transform_11(%arg0: i32) -> (i32, i32) {
    %c0_i32 = arith.constant 0 : i32
    %c0_i32_0 = arith.constant 0 : i32
    %c0_i32_1 = arith.constant 0 : i32
    return %c0_i32, %c0_i32_0 : i32, i32
  }
  func.func @transform_12(%arg0: i32) -> (i32, i32) {
    %c0_i32 = arith.constant 0 : i32
    %c0_i32_0 = arith.constant 0 : i32
    return %arg0, %c0_i32 : i32, i32
  }
  func.func @transform_13(%arg0: i32) -> (i32, i32) {
    %c0_i32 = arith.constant 0 : i32
    %c0_i32_0 = arith.constant 0 : i32
    return %arg0, %c0_i32 : i32, i32
  }
}

module attributes {stable_mosaic.version = 11 : i64} {
  func.func @_bn_kernel(%arg0: i32, %arg1: memref<2x128xf32, #tpu.memory_space<vmem>>, %arg2: memref<2x128xf32, #tpu.memory_space<vmem>>, %arg3: memref<3x128xf32, #tpu.memory_space<vmem>>, %arg4: memref<2x128xf32, #tpu.memory_space<vmem>>, %arg5: memref<2x128xf32, #tpu.memory_space<vmem>>, %arg6: memref<2x128xf32, #tpu.memory_space<vmem>>) attributes {dimension_semantics = [#tpu.dimension_semantics<parallel>], iteration_bounds = array<i64: 2>, scalar_prefetch = 0 : i64, scratch_operands = 0 : i64, tpu.core_type = #tpu.core_type<tc>, window_params = [{transform_indices = @transform_0, window_bounds = array<i64: 2, 128>}, {transform_indices = @transform_1, window_bounds = array<i64: 2, 128>}, {transform_indices = @transform_2, window_bounds = array<i64: 3, 128>}, {transform_indices = @transform_3, window_bounds = array<i64: 2, 128>}, {transform_indices = @transform_4, window_bounds = array<i64: 2, 128>}, {transform_indices = @transform_5, window_bounds = array<i64: 2, 128>}]} {
    %c0 = arith.constant 0 : index
    %c0_0 = arith.constant 0 : index
    %0 = vector.load %arg1[%c0, %c0_0] : memref<2x128xf32, #tpu.memory_space<vmem>>, vector<2x128xf32>
    %c0_1 = arith.constant 0 : index
    %c0_2 = arith.constant 0 : index
    %1 = vector.load %arg2[%c0_1, %c0_2] : memref<2x128xf32, #tpu.memory_space<vmem>>, vector<2x128xf32>
    %c0_3 = arith.constant 0 : index
    %c0_4 = arith.constant 0 : index
    %2 = vector.load %arg3[%c0_3, %c0_4] : memref<3x128xf32, #tpu.memory_space<vmem>>, vector<3x128xf32>
    %c0_5 = arith.constant 0 : index
    %c0_6 = arith.constant 0 : index
    %3 = vector.load %arg4[%c0_5, %c0_6] : memref<2x128xf32, #tpu.memory_space<vmem>>, vector<2x128xf32>
    %cst = arith.constant dense<0.000000e+00> : vector<128xf32>
    %4 = vector.multi_reduction <add>, %0, %cst [0] : vector<2x128xf32> to vector<128xf32>
    %5 = vector.shape_cast %4 : vector<128xf32> to vector<1x128xf32>
    %cst_7 = arith.constant 2.000000e+00 : f32
    %6 = vector.broadcast %cst_7 : f32 to vector<1x128xf32>
    %7 = arith.divf %5, %6 : vector<1x128xf32>
    %cst_8 = arith.constant dense<0.000000e+00> : vector<128xf32>
    %8 = vector.multi_reduction <add>, %1, %cst_8 [0] : vector<2x128xf32> to vector<128xf32>
    %9 = vector.shape_cast %8 : vector<128xf32> to vector<1x128xf32>
    %cst_9 = arith.constant 2.000000e+00 : f32
    %10 = vector.broadcast %cst_9 : f32 to vector<1x128xf32>
    %11 = arith.divf %9, %10 : vector<1x128xf32>
    %12 = vector.broadcast %7 : vector<1x128xf32> to vector<2x128xf32>
    %13 = arith.subf %0, %12 : vector<2x128xf32>
    %14 = vector.broadcast %11 : vector<1x128xf32> to vector<2x128xf32>
    %15 = arith.subf %1, %14 : vector<2x128xf32>
    %16 = arith.mulf %13, %13 : vector<2x128xf32>
    %cst_10 = arith.constant dense<0.000000e+00> : vector<128xf32>
    %17 = vector.multi_reduction <add>, %16, %cst_10 [0] : vector<2x128xf32> to vector<128xf32>
    %18 = vector.shape_cast %17 : vector<128xf32> to vector<1x128xf32>
    %cst_11 = arith.constant 2.000000e+00 : f32
    %19 = vector.broadcast %cst_11 : f32 to vector<1x128xf32>
    %20 = arith.divf %18, %19 : vector<1x128xf32>
    %cst_12 = arith.constant 9.99999974E-6 : f32
    %21 = vector.broadcast %cst_12 : f32 to vector<1x128xf32>
    %22 = arith.addf %20, %21 : vector<1x128xf32>
    %23 = arith.mulf %15, %15 : vector<2x128xf32>
    %cst_13 = arith.constant dense<0.000000e+00> : vector<128xf32>
    %24 = vector.multi_reduction <add>, %23, %cst_13 [0] : vector<2x128xf32> to vector<128xf32>
    %25 = vector.shape_cast %24 : vector<128xf32> to vector<1x128xf32>
    %cst_14 = arith.constant 2.000000e+00 : f32
    %26 = vector.broadcast %cst_14 : f32 to vector<1x128xf32>
    %27 = arith.divf %25, %26 : vector<1x128xf32>
    %cst_15 = arith.constant 9.99999974E-6 : f32
    %28 = vector.broadcast %cst_15 : f32 to vector<1x128xf32>
    %29 = arith.addf %27, %28 : vector<1x128xf32>
    %30 = arith.mulf %13, %15 : vector<2x128xf32>
    %cst_16 = arith.constant dense<0.000000e+00> : vector<128xf32>
    %31 = vector.multi_reduction <add>, %30, %cst_16 [0] : vector<2x128xf32> to vector<128xf32>
    %32 = vector.shape_cast %31 : vector<128xf32> to vector<1x128xf32>
    %cst_17 = arith.constant 2.000000e+00 : f32
    %33 = vector.broadcast %cst_17 : f32 to vector<1x128xf32>
    %34 = arith.divf %32, %33 : vector<1x128xf32>
    %35 = arith.mulf %22, %29 : vector<1x128xf32>
    %36 = arith.mulf %34, %34 : vector<1x128xf32>
    %37 = arith.subf %35, %36 : vector<1x128xf32>
    %38 = math.sqrt %37 : vector<1x128xf32>
    %39 = arith.addf %29, %22 : vector<1x128xf32>
    %cst_18 = arith.constant 2.000000e+00 : f32
    %40 = vector.broadcast %cst_18 : f32 to vector<1x128xf32>
    %41 = arith.mulf %40, %38 : vector<1x128xf32>
    %42 = arith.addf %39, %41 : vector<1x128xf32>
    %43 = math.sqrt %42 : vector<1x128xf32>
    %44 = arith.mulf %38, %43 : vector<1x128xf32>
    %45 = tpu.reciprocal %44 {approx = true} : vector<1x128xf32> -> vector<1x128xf32>
    %46 = arith.addf %29, %38 : vector<1x128xf32>
    %47 = arith.mulf %46, %45 : vector<1x128xf32>
    %48 = arith.addf %22, %38 : vector<1x128xf32>
    %49 = arith.mulf %48, %45 : vector<1x128xf32>
    %cst_19 = arith.constant 0.000000e+00 : f32
    %50 = vector.broadcast %cst_19 : f32 to vector<1x128xf32>
    %51 = arith.subf %50, %34 : vector<1x128xf32>
    %52 = arith.mulf %51, %45 : vector<1x128xf32>
    %53 = vector.broadcast %47 : vector<1x128xf32> to vector<2x128xf32>
    %54 = arith.mulf %53, %13 : vector<2x128xf32>
    %55 = vector.broadcast %52 : vector<1x128xf32> to vector<2x128xf32>
    %56 = arith.mulf %55, %15 : vector<2x128xf32>
    %57 = arith.addf %54, %56 : vector<2x128xf32>
    %58 = vector.broadcast %49 : vector<1x128xf32> to vector<2x128xf32>
    %59 = arith.mulf %58, %15 : vector<2x128xf32>
    %60 = vector.broadcast %52 : vector<1x128xf32> to vector<2x128xf32>
    %61 = arith.mulf %60, %13 : vector<2x128xf32>
    %62 = arith.addf %59, %61 : vector<2x128xf32>
    %63 = vector.extract_strided_slice %2 {offsets = [0, 0], sizes = [1, 128], strides = [1, 1]} : vector<3x128xf32> to vector<1x128xf32>
    %64 = vector.extract_strided_slice %2 {offsets = [1, 0], sizes = [1, 128], strides = [1, 1]} : vector<3x128xf32> to vector<1x128xf32>
    %65 = vector.extract_strided_slice %2 {offsets = [2, 0], sizes = [1, 128], strides = [1, 1]} : vector<3x128xf32> to vector<1x128xf32>
    %66 = vector.extract_strided_slice %3 {offsets = [0, 0], sizes = [1, 128], strides = [1, 1]} : vector<2x128xf32> to vector<1x128xf32>
    %67 = vector.extract_strided_slice %3 {offsets = [1, 0], sizes = [1, 128], strides = [1, 1]} : vector<2x128xf32> to vector<1x128xf32>
    %68 = vector.broadcast %63 : vector<1x128xf32> to vector<2x128xf32>
    %69 = arith.mulf %68, %57 : vector<2x128xf32>
    %70 = vector.broadcast %65 : vector<1x128xf32> to vector<2x128xf32>
    %71 = arith.mulf %70, %62 : vector<2x128xf32>
    %72 = arith.addf %69, %71 : vector<2x128xf32>
    %73 = vector.broadcast %66 : vector<1x128xf32> to vector<2x128xf32>
    %74 = arith.addf %72, %73 : vector<2x128xf32>
    %75 = vector.broadcast %65 : vector<1x128xf32> to vector<2x128xf32>
    %76 = arith.mulf %75, %57 : vector<2x128xf32>
    %77 = vector.broadcast %64 : vector<1x128xf32> to vector<2x128xf32>
    %78 = arith.mulf %77, %62 : vector<2x128xf32>
    %79 = arith.addf %76, %78 : vector<2x128xf32>
    %80 = vector.broadcast %67 : vector<1x128xf32> to vector<2x128xf32>
    %81 = arith.addf %79, %80 : vector<2x128xf32>
    %c0_20 = arith.constant 0 : index
    %c0_21 = arith.constant 0 : index
    %82 = vector.load %arg5[%c0_20, %c0_21] : memref<2x128xf32, #tpu.memory_space<vmem>>, vector<2x128xf32>
    tpu.vector_store %arg5[%c0_20, %c0_21], %74 {strides = array<i32>} : memref<2x128xf32, #tpu.memory_space<vmem>>, vector<2x128xf32>,
    %c0_22 = arith.constant 0 : index
    %c0_23 = arith.constant 0 : index
    %83 = vector.load %arg6[%c0_22, %c0_23] : memref<2x128xf32, #tpu.memory_space<vmem>>, vector<2x128xf32>
    tpu.vector_store %arg6[%c0_22, %c0_23], %81 {strides = array<i32>} : memref<2x128xf32, #tpu.memory_space<vmem>>, vector<2x128xf32>,
    return
  }
  func.func @transform_0(%arg0: i32) -> (i32, i32) {
    %c0_i32 = arith.constant 0 : i32
    %c0_i32_0 = arith.constant 0 : i32
    return %c0_i32, %arg0 : i32, i32
  }
  func.func @transform_1(%arg0: i32) -> (i32, i32) {
    %c0_i32 = arith.constant 0 : i32
    %c0_i32_0 = arith.constant 0 : i32
    return %c0_i32, %arg0 : i32, i32
  }
  func.func @transform_2(%arg0: i32) -> (i32, i32) {
    %c0_i32 = arith.constant 0 : i32
    %c0_i32_0 = arith.constant 0 : i32
    return %c0_i32, %arg0 : i32, i32
  }
  func.func @transform_3(%arg0: i32) -> (i32, i32) {
    %c0_i32 = arith.constant 0 : i32
    %c0_i32_0 = arith.constant 0 : i32
    return %c0_i32, %arg0 : i32, i32
  }
  func.func @transform_4(%arg0: i32) -> (i32, i32) {
    %c0_i32 = arith.constant 0 : i32
    %c0_i32_0 = arith.constant 0 : i32
    return %c0_i32, %arg0 : i32, i32
  }
  func.func @transform_5(%arg0: i32) -> (i32, i32) {
    %c0_i32 = arith.constant 0 : i32
    %c0_i32_0 = arith.constant 0 : i32
    return %c0_i32, %arg0 : i32, i32
  }
}

</mosaic_0001>

<llo_original>
// kernel: tst_encoder_forward.6
$region0: #{tst_encoder_forward.6}
  #allocation0 [shape = 'u32[]', space=smem, size = 0x4, offset = 0x4, fixed_abs, tag = 'smem constant byte address 0x4 - core index']
  #allocation1 [shape = 'u32[144,128]{1,0:T(1,128)}', space=vmem, size = 0x12000, scoped, tag = 'internal scratch']
  %s0 = inlined_call_operand.vmem [shape: f32[2,256], index: 0, kind: input, shape index: {}]
  %s1 = inlined_call_operand.vmem [shape: f32[2,256], index: 1, kind: input, shape index: {}]
  %s2 = inlined_call_operand.vmem [shape: f32[1,256], index: 2, kind: input, shape index: {}]
  %s3 = inlined_call_operand.vmem [shape: f32[1,256], index: 3, kind: input, shape index: {}]
  %s4 = inlined_call_operand.vmem [shape: f32[3,256], index: 4, kind: input, shape index: {}]
  %s5 = inlined_call_operand.vmem [shape: f32[2,256], index: 5, kind: input, shape index: {}]
  %s6 = inlined_call_operand.vmem [shape: f32[2,256], index: 6, kind: output, shape index: {0}]
  %s7 = inlined_call_operand.vmem [shape: f32[2,256], index: 7, kind: output, shape index: {1}]
  %8 = xla_tuple %s6, %s7
  %s9 = sld [smem:[#allocation0]]
  $region65: #{tst_encoder_forward.6} parent=0
    _
  %s11 = ssub.s32 1, %s9
  %s12 = scalar_select 0, %s11, %s9
  loop: start=0, step=1, limit=4
  $region2: #{tst_encoder_forward.6} parent=0 // loop_pre_header
    _
  $region3: #{tst_encoder_forward.6} parent=0 // loop_header
    %s14 = sphi 0, %s18
    %p15 = scmp.ge.s32.totalorder %s14, 4
    %s24 = sphi 0, %s26
    %s27 = sphi 0, %s24
    %s28 = sphi 0, %s27
    %s44 = sphi 0, %s28
    %s50 = sphi 0, %s52
    %s53 = sphi 0, %s50
    %s54 = sphi 0, %s53
    %s70 = sphi 0, %s54
    %s76 = sphi 0, %s78
    %s79 = sphi 0, %s76
    %s80 = sphi 0, %s79
    %s96 = sphi 0, %s80
    %s102 = sphi 0, %s104
    %s105 = sphi 0, %s102
    %s106 = sphi 0, %s105
    %s122 = sphi 0, %s106
    %s128 = sphi 0, %s130
    %s131 = sphi 0, %s128
    %s132 = sphi 0, %s131
    %s148 = sphi 0, %s132
    %s154 = sphi 0, %s156
    %s157 = sphi 0, %s154
    %s158 = sphi 0, %s157
    %s174 = sphi 0, %s158
    %s180 = sphi 0, %s182
    %s183 = sphi 0, %s180
    %s184 = sphi 0, %s183
    %s200 = sphi 0, %s184
    %s206 = sphi 0, %s208
    %s209 = sphi 0, %s206
    %s210 = sphi 0, %s209
    %s226 = sphi 0, %s210
  $region4: #{tst_encoder_forward.6} parent=0 // loop_header_branch
    %17 = sbr.rel (%p15) target = $region8
  $region5: #{tst_encoder_forward.6} parent=0 // loop_body
    %s19 = ssub.s32 %s14, 1
    %s20 = ssub.s32 %s14, 2
    %s21 = sadd.s32 %s14, 1
    %s22 = ssub.s32 %s14, %s21
    %p23 = scmp.eq.s32.totalorder %s22, 0
    %s25 = sadd.s32 %s24, 1
    %s26 = scalar_select %p23, %s24, %s25
    %p29 = pneg %p23
    %p30 = scmp.eq.s32.totalorder %s14, 1
    %p31 = por %p29, %p30
    %p32 = scmp.ne.s32.totalorder %s24, %s27
    %p33 = scmp.eq.s32.totalorder %s14, 0
    %p34 = por %p32, %p33
    %p35 = scmp.ne.s32.totalorder %s24, %s27
    %p36 = scmp.eq.s32.totalorder %s19, 1
    %p37 = por %p35, %p36
    %p38 = scmp.ne.s32.totalorder %s27, %s28
    %p39 = scmp.eq.s32.totalorder %s19, 0
    %p40 = por %p38, %p39
    %p41 = scmp.ne.s32.totalorder %s27, %s28
    %p42 = scmp.eq.s32.totalorder %s20, 1
    %p43 = por %p41, %p42
    %p45 = scmp.ne.s32.totalorder %s28, %s44
    %p46 = scmp.eq.s32.totalorder %s20, 0
    %p47 = por %p45, %p46
    %s48 = ssub.s32 %s14, %s21
    %p49 = scmp.eq.s32.totalorder %s48, 0
    %s51 = sadd.s32 %s50, 1
    %s52 = scalar_select %p49, %s50, %s51
    %p55 = pneg %p49
    %p56 = scmp.eq.s32.totalorder %s14, 1
    %p57 = por %p55, %p56
    %p58 = scmp.ne.s32.totalorder %s50, %s53
    %p59 = scmp.eq.s32.totalorder %s14, 0
    %p60 = por %p58, %p59
    %p61 = scmp.ne.s32.totalorder %s50, %s53
    %p62 = scmp.eq.s32.totalorder %s19, 1
    %p63 = por %p61, %p62
    %p64 = scmp.ne.s32.totalorder %s53, %s54
    %p65 = scmp.eq.s32.totalorder %s19, 0
    %p66 = por %p64, %p65
    %p67 = scmp.ne.s32.totalorder %s53, %s54
    %p68 = scmp.eq.s32.totalorder %s20, 1
    %p69 = por %p67, %p68
    %p71 = scmp.ne.s32.totalorder %s54, %s70
    %p72 = scmp.eq.s32.totalorder %s20, 0
    %p73 = por %p71, %p72
    %s74 = ssub.s32 %s14, %s21
    %p75 = scmp.eq.s32.totalorder %s74, 0
    %s77 = sadd.s32 %s76, 1
    %s78 = scalar_select %p75, %s76, %s77
    %p81 = pneg %p75
    %p82 = scmp.eq.s32.totalorder %s14, 1
    %p83 = por %p81, %p82
    %p84 = scmp.ne.s32.totalorder %s76, %s79
    %p85 = scmp.eq.s32.totalorder %s14, 0
    %p86 = por %p84, %p85
    %p87 = scmp.ne.s32.totalorder %s76, %s79
    %p88 = scmp.eq.s32.totalorder %s19, 1
    %p89 = por %p87, %p88
    %p90 = scmp.ne.s32.totalorder %s79, %s80
    %p91 = scmp.eq.s32.totalorder %s19, 0
    %p92 = por %p90, %p91
    %p93 = scmp.ne.s32.totalorder %s79, %s80
    %p94 = scmp.eq.s32.totalorder %s20, 1
    %p95 = por %p93, %p94
    %p97 = scmp.ne.s32.totalorder %s80, %s96
    %p98 = scmp.eq.s32.totalorder %s20, 0
    %p99 = por %p97, %p98
    %s100 = ssub.s32 %s14, %s21
    %p101 = scmp.eq.s32.totalorder %s100, 0
    %s103 = sadd.s32 %s102, 1
    %s104 = scalar_select %p101, %s102, %s103
    %p107 = pneg %p101
    %p108 = scmp.eq.s32.totalorder %s14, 1
    %p109 = por %p107, %p108
    %p110 = scmp.ne.s32.totalorder %s102, %s105
    %p111 = scmp.eq.s32.totalorder %s14, 0
    %p112 = por %p110, %p111
    %p113 = scmp.ne.s32.totalorder %s102, %s105
    %p114 = scmp.eq.s32.totalorder %s19, 1
    %p115 = por %p113, %p114
    %p116 = scmp.ne.s32.totalorder %s105, %s106
    %p117 = scmp.eq.s32.totalorder %s19, 0
    %p118 = por %p116, %p117
    %p119 = scmp.ne.s32.totalorder %s105, %s106
    %p120 = scmp.eq.s32.totalorder %s20, 1
    %p121 = por %p119, %p120
    %p123 = scmp.ne.s32.totalorder %s106, %s122
    %p124 = scmp.eq.s32.totalorder %s20, 0
    %p125 = por %p123, %p124
    %s126 = ssub.s32 %s14, %s21
    %p127 = scmp.eq.s32.totalorder %s126, 0
    %s129 = sadd.s32 %s128, 1
    %s130 = scalar_select %p127, %s128, %s129
    %p133 = pneg %p127
    %p134 = scmp.eq.s32.totalorder %s14, 1
    %p135 = por %p133, %p134
    %p136 = scmp.ne.s32.totalorder %s128, %s131
    %p137 = scmp.eq.s32.totalorder %s14, 0
    %p138 = por %p136, %p137
    %p139 = scmp.ne.s32.totalorder %s128, %s131
    %p140 = scmp.eq.s32.totalorder %s19, 1
    %p141 = por %p139, %p140
    %p142 = scmp.ne.s32.totalorder %s131, %s132
    %p143 = scmp.eq.s32.totalorder %s19, 0
    %p144 = por %p142, %p143
    %p145 = scmp.ne.s32.totalorder %s131, %s132
    %p146 = scmp.eq.s32.totalorder %s20, 1
    %p147 = por %p145, %p146
    %p149 = scmp.ne.s32.totalorder %s132, %s148
    %p150 = scmp.eq.s32.totalorder %s20, 0
    %p151 = por %p149, %p150
    %s152 = ssub.s32 %s14, %s21
    %p153 = scmp.eq.s32.totalorder %s152, 0
    %s155 = sadd.s32 %s154, 1
    %s156 = scalar_select %p153, %s154, %s155
    %p159 = pneg %p153
    %p160 = scmp.eq.s32.totalorder %s14, 1
    %p161 = por %p159, %p160
    %p162 = scmp.ne.s32.totalorder %s154, %s157
    %p163 = scmp.eq.s32.totalorder %s14, 0
    %p164 = por %p162, %p163
    %p165 = scmp.ne.s32.totalorder %s154, %s157
    %p166 = scmp.eq.s32.totalorder %s19, 1
    %p167 = por %p165, %p166
    %p168 = scmp.ne.s32.totalorder %s157, %s158
    %p169 = scmp.eq.s32.totalorder %s19, 0
    %p170 = por %p168, %p169
    %p171 = scmp.ne.s32.totalorder %s157, %s158
    %p172 = scmp.eq.s32.totalorder %s20, 1
    %p173 = por %p171, %p172
    %p175 = scmp.ne.s32.totalorder %s158, %s174
    %p176 = scmp.eq.s32.totalorder %s20, 0
    %p177 = por %p175, %p176
    %s178 = ssub.s32 %s14, %s21
    %p179 = scmp.eq.s32.totalorder %s178, 0
    %s181 = sadd.s32 %s180, 1
    %s182 = scalar_select %p179, %s180, %s181
    %p185 = pneg %p179
    %p186 = scmp.eq.s32.totalorder %s14, 1
    %p187 = por %p185, %p186
    %p188 = scmp.ne.s32.totalorder %s180, %s183
    %p189 = scmp.eq.s32.totalorder %s14, 0
    %p190 = por %p188, %p189
    %p191 = scmp.ne.s32.totalorder %s180, %s183
    %p192 = scmp.eq.s32.totalorder %s19, 1
    %p193 = por %p191, %p192
    %p194 = scmp.ne.s32.totalorder %s183, %s184
    %p195 = scmp.eq.s32.totalorder %s19, 0
    %p196 = por %p194, %p195
    %p197 = scmp.ne.s32.totalorder %s183, %s184
    %p198 = scmp.eq.s32.totalorder %s20, 1
    %p199 = por %p197, %p198
    %p201 = scmp.ne.s32.totalorder %s184, %s200
    %p202 = scmp.eq.s32.totalorder %s20, 0
    %p203 = por %p201, %p202
    %s204 = ssub.s32 %s14, %s21
    %p205 = scmp.eq.s32.totalorder %s204, 0
    %s207 = sadd.s32 %s206, 1
    %s208 = scalar_select %p205, %s206, %s207
    %p211 = pneg %p205
    %p212 = scmp.eq.s32.totalorder %s14, 1
    %p213 = por %p211, %p212
    %p214 = scmp.ne.s32.totalorder %s206, %s209
    %p215 = scmp.eq.s32.totalorder %s14, 0
    %p216 = por %p214, %p215
    %p217 = scmp.ne.s32.totalorder %s206, %s209
    %p218 = scmp.eq.s32.totalorder %s19, 1
    %p219 = por %p217, %p218
    %p220 = scmp.ne.s32.totalorder %s209, %s210
    %p221 = scmp.eq.s32.totalorder %s19, 0
    %p222 = por %p220, %p221
    %p223 = scmp.ne.s32.totalorder %s209, %s210
    %p224 = scmp.eq.s32.totalorder %s20, 1
    %p225 = por %p223, %p224
    %p227 = scmp.ne.s32.totalorder %s210, %s226
    %p228 = scmp.eq.s32.totalorder %s20, 0
    %p229 = por %p227, %p228
    %p230 = scmp.le.s32.totalorder 1, %s14
    %p231 = scmp.lt.s32.totalorder %s14, 3
    %p232 = pnand %p230, %p231
    %p233 = pneg %p232
    // Predicated region
    $region9: #{tst_encoder_forward.6} parent=5 // pred_check
      _
    $region10: #{tst_encoder_forward.6} parent=5 // pred_check_branch
      %235 = sbr.rel (%p232) target = $region12
    $region11: #{tst_encoder_forward.6} parent=5 // pred_region
      %s236 = ssub.s32 %s14, 1
    $region12: #{tst_encoder_forward.6} parent=5 // pred_fallthru
      _
    %p237 = scmp.lt.s32.totalorder %s14, 2
    // Predicated region
    $region13: #{tst_encoder_forward.6} parent=5 // pred_check
      %p238 = pneg %p237
    $region14: #{tst_encoder_forward.6} parent=5 // pred_check_branch
      %240 = sbr.rel (%p238) target = $region16
    $region15: #{tst_encoder_forward.6} parent=5 // pred_region
      // Predicated region
      $region17: #{tst_encoder_forward.6} parent=15 // pred_check
        %p241 = pneg %p34
      $region18: #{tst_encoder_forward.6} parent=15 // pred_check_branch
        %243 = sbr.rel (%p241) target = $region20
      $region19: #{tst_encoder_forward.6} parent=15 // pred_region
        %p244 = scmp.lt.s32.totalorder %s14, 1
        %s245 = scalar_select %p244, %s14, 1
        %s246 = smul.addr %s245, 2
        %s247 = scalar_lea.vmem %s0, %s246
      $region20: #{tst_encoder_forward.6} parent=15 // pred_fallthru
        _
      // Predicated region
      $region21: #{tst_encoder_forward.6} parent=15 // pred_check
        %p248 = pneg %p60
      $region22: #{tst_encoder_forward.6} parent=15 // pred_check_branch
        %250 = sbr.rel (%p248) target = $region24
      $region23: #{tst_encoder_forward.6} parent=15 // pred_region
        %p251 = scmp.lt.s32.totalorder %s14, 1
        %s252 = scalar_select %p251, %s14, 1
        %s253 = smul.addr %s252, 2
        %s254 = scalar_lea.vmem %s1, %s253
      $region24: #{tst_encoder_forward.6} parent=15 // pred_fallthru
        _
      // Predicated region
      $region25: #{tst_encoder_forward.6} parent=15 // pred_check
        %p255 = pneg %p86
      $region26: #{tst_encoder_forward.6} parent=15 // pred_check_branch
        %257 = sbr.rel (%p255) target = $region28
      $region27: #{tst_encoder_forward.6} parent=15 // pred_region
        %p258 = scmp.lt.s32.totalorder %s14, 1
        %s259 = scalar_select %p258, %s14, 1
        %s260 = scalar_lea.vmem %s2, %s259
      $region28: #{tst_encoder_forward.6} parent=15 // pred_fallthru
        _
      // Predicated region
      $region29: #{tst_encoder_forward.6} parent=15 // pred_check
        %p261 = pneg %p112
      $region30: #{tst_encoder_forward.6} parent=15 // pred_check_branch
        %263 = sbr.rel (%p261) target = $region32
      $region31: #{tst_encoder_forward.6} parent=15 // pred_region
        %p264 = scmp.lt.s32.totalorder %s14, 1
        %s265 = scalar_select %p264, %s14, 1
        %s266 = scalar_lea.vmem %s3, %s265
      $region32: #{tst_encoder_forward.6} parent=15 // pred_fallthru
        _
      // Predicated region
      $region33: #{tst_encoder_forward.6} parent=15 // pred_check
        %p267 = pneg %p138
      $region34: #{tst_encoder_forward.6} parent=15 // pred_check_branch
        %269 = sbr.rel (%p267) target = $region36
      $region35: #{tst_encoder_forward.6} parent=15 // pred_region
        %p270 = scmp.lt.s32.totalorder %s14, 1
        %s271 = scalar_select %p270, %s14, 1
        %s272 = smul.addr %s271, 4
        %s273 = scalar_lea.vmem %s4, %s272
      $region36: #{tst_encoder_forward.6} parent=15 // pred_fallthru
        _
      // Predicated region
      $region37: #{tst_encoder_forward.6} parent=15 // pred_check
        %p274 = pneg %p164
      $region38: #{tst_encoder_forward.6} parent=15 // pred_check_branch
        %276 = sbr.rel (%p274) target = $region40
      $region39: #{tst_encoder_forward.6} parent=15 // pred_region
        %p277 = scmp.lt.s32.totalorder %s14, 1
        %s278 = scalar_select %p277, %s14, 1
        %s279 = smul.addr %s278, 2
        %s280 = scalar_lea.vmem %s5, %s279
      $region40: #{tst_encoder_forward.6} parent=15 // pred_fallthru
        _
    $region16: #{tst_encoder_forward.6} parent=5 // pred_fallthru
      _
    %p281 = scmp.le.s32.totalorder 1, %s14
    %p282 = scmp.lt.s32.totalorder %s14, 3
    %p283 = pnand %p281, %p282
    %p284 = pneg %p283
    // Predicated region
    $region41: #{tst_encoder_forward.6} parent=5 // pred_check
      _
    $region42: #{tst_encoder_forward.6} parent=5 // pred_check_branch
      %286 = sbr.rel (%p283) target = $region44
    $region43: #{tst_encoder_forward.6} parent=5 // pred_region
      %s287 = ssub.s32 %s14, 1
      %p288 = scmp.lt.s32.totalorder %s19, 1
      %s289 = scalar_select %p288, %s19, 1
      %s290 = smul.addr %s289, 2
      %s291 = scalar_lea.vmem %s0, %s290
      %p292 = pneg %p40
      %p293 = pneg %p37
      %p294 = scmp.lt.s32.totalorder %s19, 1
      %s295 = scalar_select %p294, %s19, 1
      %s296 = smul.addr %s295, 2
      %s297 = scalar_lea.vmem %s1, %s296
      %p298 = pneg %p66
      %p299 = pneg %p63
      %p300 = scmp.lt.s32.totalorder %s19, 1
      %s301 = scalar_select %p300, %s19, 1
      %s302 = scalar_lea.vmem %s2, %s301
      %p303 = pneg %p92
      %p304 = pneg %p89
      %p305 = scmp.lt.s32.totalorder %s19, 1
      %s306 = scalar_select %p305, %s19, 1
      %s307 = scalar_lea.vmem %s3, %s306
      %p308 = pneg %p118
      %p309 = pneg %p115
      %p310 = scmp.lt.s32.totalorder %s19, 1
      %s311 = scalar_select %p310, %s19, 1
      %s312 = smul.addr %s311, 4
      %s313 = scalar_lea.vmem %s4, %s312
      %p314 = pneg %p144
      %p315 = pneg %p141
      %p316 = scmp.lt.s32.totalorder %s19, 1
      %s317 = scalar_select %p316, %s19, 1
      %s318 = smul.addr %s317, 2
      %s319 = scalar_lea.vmem %s5, %s318
      %p320 = pneg %p170
      %p321 = pneg %p167
      %p322 = pneg %p196
      %p323 = pneg %p193
      %p324 = scmp.lt.s32.totalorder %s19, 1
      %s325 = scalar_select %p324, %s19, 1
      %s326 = smul.addr %s325, 2
      %s327 = scalar_lea.vmem %s6, %s326
      %p328 = pneg %p222
      %p329 = pneg %p219
      %p330 = scmp.lt.s32.totalorder %s19, 1
      %s331 = scalar_select %p330, %s19, 1
      %s332 = smul.addr %s331, 2
      %s333 = scalar_lea.vmem %s7, %s332
      %p334 = scmp.lt.s32.totalorder %s19, 1
      %s335 = scalar_select %p334, %s19, 1
      %s336 = smul.addr %s335, 2
      %s337 = scalar_lea.vmem %s0, %s336
      %p338 = scmp.lt.s32.totalorder %s19, 1
      %s339 = scalar_select %p338, %s19, 1
      %s340 = smul.addr %s339, 2
      %s341 = scalar_lea.vmem %s1, %s340
      %p342 = scmp.lt.s32.totalorder %s19, 1
      %s343 = scalar_select %p342, %s19, 1
      %s344 = scalar_lea.vmem %s2, %s343
      %p345 = scmp.lt.s32.totalorder %s19, 1
      %s346 = scalar_select %p345, %s19, 1
      %s347 = scalar_lea.vmem %s3, %s346
      %p348 = scmp.lt.s32.totalorder %s19, 1
      %s349 = scalar_select %p348, %s19, 1
      %s350 = smul.addr %s349, 4
      %s351 = scalar_lea.vmem %s4, %s350
      %p352 = scmp.lt.s32.totalorder %s19, 1
      %s353 = scalar_select %p352, %s19, 1
      %s354 = smul.addr %s353, 2
      %s355 = scalar_lea.vmem %s5, %s354
      %p356 = scmp.lt.s32.totalorder %s19, 1
      %s357 = scalar_select %p356, %s19, 1
      %s358 = smul.addr %s357, 2
      %s359 = scalar_lea.vmem %s6, %s358
      %p360 = scmp.lt.s32.totalorder %s19, 1
      %s361 = scalar_select %p360, %s19, 1
      %s362 = smul.addr %s361, 2
      %s363 = scalar_lea.vmem %s7, %s362
      %v364 = vld [vmem:[%s337] sm:$0x3]
      %v365 = vld [vmem:[%s341] sm:$0x3]
      %v366 = vld [vmem:[%s344] sm:$0x1]
      %v367 = vld [vmem:[%s347] sm:$0x1]
      %v368 = vadd.f32 %v366, 1.0
      %v370 = vlaneseq
      %v371 = vshrl.u32 %v370, 7
      %v372 = vsub.s32 0, %v371
      %v373 = vrot.slane %v368, %v372
      %v375 = vmul.f32 %v364, %v373
      %v377 = vlaneseq
      %v378 = vshrl.u32 %v377, 7
      %v379 = vsub.s32 0, %v378
      %v380 = vrot.slane %v367, %v379
      %v382 = vmul.f32 %v365, %v380
      %v383 = vsub.f32 %v375, %v382
      %v384 = vmul.f32 %v364, %v380
      %v385 = vmul.f32 %v365, %v373
      %v386 = vadd.f32 %v384, %v385
      %v387 = vld [vmem:[%s351] sm:$0x7]
      %v388 = vld [vmem:[%s355] sm:$0x3]
      %vm389 = vcmask 1041408
      %v390 = vsel %vm389, %v383, 0.0
      %v391 = vrot.slane %v390, 4
      %v392 = vadd.f32 %v390, %v391
      %v393 = vrot.slane %v392, 2
      %v394 = vadd.f32 %v392, %v393
      %v395 = vrot.slane %v394, 1
      %v396 = vadd.f32 %v394, %v395
      %v397 = vrcp.pop 2.0
      %v398 = vmul.f32 %v396, %v397
      %v399 = vsel %vm389, %v386, 0.0
      %v400 = vrot.slane %v399, 4
      %v401 = vadd.f32 %v399, %v400
      %v402 = vrot.slane %v401, 2
      %v403 = vadd.f32 %v401, %v402
      %v404 = vrot.slane %v403, 1
      %v405 = vadd.f32 %v403, %v404
      %v406 = vmul.f32 %v405, %v397
      %v407 = vsub.f32 %v383, %v398
      %v408 = vsub.f32 %v386, %v406
      %v409 = vmul.f32 %v407, %v407
      %v410 = vsel %vm389, %v409, 0.0
      %v411 = vrot.slane %v410, 4
      %v412 = vadd.f32 %v410, %v411
      %v413 = vrot.slane %v412, 2
      %v414 = vadd.f32 %v412, %v413
      %v415 = vrot.slane %v414, 1
      %v416 = vadd.f32 %v414, %v415
      %v417 = vmul.f32 %v416, %v397
      %v418 = vadd.f32 %v417, 1e-05
      %v419 = vmul.f32 %v408, %v408
      %v420 = vsel %vm389, %v419, 0.0
      %v421 = vrot.slane %v420, 4
      %v422 = vadd.f32 %v420, %v421
      %v423 = vrot.slane %v422, 2
      %v424 = vadd.f32 %v422, %v423
      %v425 = vrot.slane %v424, 1
      %v426 = vadd.f32 %v424, %v425
      %v427 = vmul.f32 %v426, %v397
      %v428 = vadd.f32 %v427, 1e-05
      %v429 = vmul.f32 %v407, %v408
      %v430 = vsel %vm389, %v429, 0.0
      %v431 = vrot.slane %v430, 4
      %v432 = vadd.f32 %v430, %v431
      %v433 = vrot.slane %v432, 2
      %v434 = vadd.f32 %v432, %v433
      %v435 = vrot.slane %v434, 1
      %v436 = vadd.f32 %v434, %v435
      %v437 = vmul.f32 %v436, %v397
      %v438 = vmul.f32 %v418, %v428
      %v439 = vmul.f32 %v437, %v437
      %v440 = vsub.f32 %v438, %v439
      %v441 = vrsqrt.pop %v440
      %v442 = vmul.f32 %v440, %v441
      %vm443 = vcmp.eq.f32.partialorder %v440, inf
      %v444 = vsel %vm443, %v440, %v442
      %vm445 = vcmp.eq.f32.partialorder %v440, 0.0
      %v446 = vand.u32 %v440, 2147483648
      %v447 = vsel %vm445, %v446, %v444
      %v448 = vadd.f32 %v428, %v418
      %v449 = vmul.f32 %v447, 2.0
      %v450 = vadd.f32 %v448, %v449
      %v451 = vrsqrt.pop %v450
      %v452 = vmul.f32 %v450, %v451
      %vm453 = vcmp.eq.f32.partialorder %v450, inf
      %v454 = vsel %vm453, %v450, %v452
      %vm455 = vcmp.eq.f32.partialorder %v450, 0.0
      %v456 = vand.u32 %v450, 2147483648
      %v457 = vsel %vm455, %v456, %v454
      %v458 = vmul.f32 %v447, %v457
      %v459 = vrcp.pop %v458
      %v460 = vadd.f32 %v428, %v447
      %v461 = vmul.f32 %v460, %v459
      %v462 = vadd.f32 %v418, %v447
      %v463 = vmul.f32 %v462, %v459
      %v464 = vsub.f32 0.0, %v437
      %v465 = vmul.f32 %v464, %v459
      %v466 = vmul.f32 %v461, %v407
      %v467 = vmul.f32 %v465, %v408
      %v468 = vadd.f32 %v466, %v467
      %v469 = vmul.f32 %v463, %v408
      %v470 = vmul.f32 %v465, %v407
      %v471 = vadd.f32 %v469, %v470
      %v472 = vlaneseq
      %v473 = vshrl.u32 %v472, 7
      %v474 = vsub.s32 0, %v473
      %v475 = vrot.slane %v387, %v474
      %v476 = vmul.f32 %v475, %v468
      %v477 = vlaneseq
      %v478 = vshrl.u32 %v477, 7
      %v479 = vsub.s32 2, %v478
      %v480 = vrot.slane %v387, %v479
      %v481 = vmul.f32 %v480, %v471
      %v482 = vadd.f32 %v476, %v481
      %v483 = vlaneseq
      %v484 = vshrl.u32 %v483, 7
      %v485 = vsub.s32 0, %v484
      %v486 = vrot.slane %v388, %v485
      %v487 = vadd.f32 %v482, %v486
      %v488 = vmul.f32 %v480, %v468
      %v489 = vlaneseq
      %v490 = vshrl.u32 %v489, 7
      %v491 = vsub.s32 1, %v490
      %v492 = vrot.slane %v387, %v491
      %v493 = vmul.f32 %v492, %v471
      %v494 = vadd.f32 %v488, %v493
      %v495 = vlaneseq
      %v496 = vshrl.u32 %v495, 7
      %v497 = vsub.s32 1, %v496
      %v498 = vrot.slane %v388, %v497
      %v499 = vadd.f32 %v494, %v498
      %500 = vst [vmem:[%s359] sm:$0x3] %v487
      %501 = vst [vmem:[%s363] sm:$0x3] %v499
      %p502 = scmp.lt.s32.totalorder %s19, 1
      %s503 = scalar_select %p502, %s19, 1
      %s504 = smul.addr %s503, 2
      %s505 = scalar_lea.vmem %s6, %s504
      %p506 = scmp.lt.s32.totalorder %s19, 1
      %s507 = scalar_select %p506, %s19, 1
      %s508 = smul.addr %s507, 2
      %s509 = scalar_lea.vmem %s7, %s508
      // Predicated region
      $region45: #{tst_encoder_forward.6} parent=43 // pred_check
        %p510 = pneg %p193
      $region46: #{tst_encoder_forward.6} parent=43 // pred_check_branch
        %512 = sbr.rel (%p510) target = $region48
      $region47: #{tst_encoder_forward.6} parent=43 // pred_region
        _
      $region48: #{tst_encoder_forward.6} parent=43 // pred_fallthru
        _
      // Predicated region
      $region49: #{tst_encoder_forward.6} parent=43 // pred_check
        %p513 = pneg %p219
      $region50: #{tst_encoder_forward.6} parent=43 // pred_check_branch
        %515 = sbr.rel (%p513) target = $region52
      $region51: #{tst_encoder_forward.6} parent=43 // pred_region
        _
      $region52: #{tst_encoder_forward.6} parent=43 // pred_fallthru
        _
    $region44: #{tst_encoder_forward.6} parent=5 // pred_fallthru
      _
    %p516 = scmp.le.s32.totalorder 2, %s14
    // Predicated region
    $region53: #{tst_encoder_forward.6} parent=5 // pred_check
      %p517 = pneg %p516
    $region54: #{tst_encoder_forward.6} parent=5 // pred_check_branch
      %519 = sbr.rel (%p517) target = $region56
    $region55: #{tst_encoder_forward.6} parent=5 // pred_region
      %s520 = ssub.s32 %s14, 2
      // Predicated region
      $region57: #{tst_encoder_forward.6} parent=55 // pred_check
        %p521 = pneg %p199
      $region58: #{tst_encoder_forward.6} parent=55 // pred_check_branch
        %523 = sbr.rel (%p521) target = $region60
      $region59: #{tst_encoder_forward.6} parent=55 // pred_region
        %p524 = scmp.lt.s32.totalorder %s20, 1
        %s525 = scalar_select %p524, %s20, 1
        %s526 = smul.addr %s525, 2
        %s527 = scalar_lea.vmem %s6, %s526
      $region60: #{tst_encoder_forward.6} parent=55 // pred_fallthru
        _
      // Predicated region
      $region61: #{tst_encoder_forward.6} parent=55 // pred_check
        %p528 = pneg %p225
      $region62: #{tst_encoder_forward.6} parent=55 // pred_check_branch
        %530 = sbr.rel (%p528) target = $region64
      $region63: #{tst_encoder_forward.6} parent=55 // pred_region
        %p531 = scmp.lt.s32.totalorder %s20, 1
        %s532 = scalar_select %p531, %s20, 1
        %s533 = smul.addr %s532, 2
        %s534 = scalar_lea.vmem %s7, %s533
      $region64: #{tst_encoder_forward.6} parent=55 // pred_fallthru
        _
    $region56: #{tst_encoder_forward.6} parent=5 // pred_fallthru
      _
  $region6: #{tst_encoder_forward.6} parent=0 // loop_footer
    %s18 = sadd.s32 1, %s14
  $region7: #{tst_encoder_forward.6} parent=0 // loop_footer_branch
    %13 = sbr.rel target = $region3
  $region8: #{tst_encoder_forward.6} parent=0 // loop_exit
    _

// kernel: tst_encoder_forward.8
$region0: #{tst_encoder_forward.8}
  #allocation0 [shape = 'u32[]', space=smem, size = 0x4, offset = 0x4, fixed_abs, tag = 'smem constant byte address 0x4 - core index']
  #allocation1 [shape = 'u32[144,128]{1,0:T(1,128)}', space=vmem, size = 0x12000, scoped, tag = 'internal scratch']
  %s0 = inlined_call_operand.vmem [shape: f32[2,256], index: 0, kind: input, shape index: {}]
  %s1 = inlined_call_operand.vmem [shape: f32[2,256], index: 1, kind: input, shape index: {}]
  %s2 = inlined_call_operand.vmem [shape: f32[3,256], index: 2, kind: input, shape index: {}]
  %s3 = inlined_call_operand.vmem [shape: f32[2,256], index: 3, kind: input, shape index: {}]
  %s4 = inlined_call_operand.vmem [shape: f32[2,256], index: 4, kind: output, shape index: {0}]
  %s5 = inlined_call_operand.vmem [shape: f32[2,256], index: 5, kind: output, shape index: {1}]
  %6 = xla_tuple %s4, %s5
  %s7 = sld [smem:[#allocation0]]
  $region57: #{tst_encoder_forward.8} parent=0
    _
  %s9 = ssub.s32 1, %s7
  %s10 = scalar_select 0, %s9, %s7
  loop: start=0, step=1, limit=4
  $region2: #{tst_encoder_forward.8} parent=0 // loop_pre_header
    _
  $region3: #{tst_encoder_forward.8} parent=0 // loop_header
    %s12 = sphi 0, %s16
    %p13 = scmp.ge.s32.totalorder %s12, 4
    %s22 = sphi 0, %s24
    %s25 = sphi 0, %s22
    %s26 = sphi 0, %s25
    %s42 = sphi 0, %s26
    %s48 = sphi 0, %s50
    %s51 = sphi 0, %s48
    %s52 = sphi 0, %s51
    %s68 = sphi 0, %s52
    %s74 = sphi 0, %s76
    %s77 = sphi 0, %s74
    %s78 = sphi 0, %s77
    %s94 = sphi 0, %s78
    %s100 = sphi 0, %s102
    %s103 = sphi 0, %s100
    %s104 = sphi 0, %s103
    %s120 = sphi 0, %s104
    %s126 = sphi 0, %s128
    %s129 = sphi 0, %s126
    %s130 = sphi 0, %s129
    %s146 = sphi 0, %s130
    %s152 = sphi 0, %s154
    %s155 = sphi 0, %s152
    %s156 = sphi 0, %s155
    %s172 = sphi 0, %s156
  $region4: #{tst_encoder_forward.8} parent=0 // loop_header_branch
    %15 = sbr.rel (%p13) target = $region8
  $region5: #{tst_encoder_forward.8} parent=0 // loop_body
    %s17 = ssub.s32 %s12, 1
    %s18 = ssub.s32 %s12, 2
    %s19 = sadd.s32 %s12, 1
    %s20 = ssub.s32 %s12, %s19
    %p21 = scmp.eq.s32.totalorder %s20, 0
    %s23 = sadd.s32 %s22, 1
    %s24 = scalar_select %p21, %s22, %s23
    %p27 = pneg %p21
    %p28 = scmp.eq.s32.totalorder %s12, 1
    %p29 = por %p27, %p28
    %p30 = scmp.ne.s32.totalorder %s22, %s25
    %p31 = scmp.eq.s32.totalorder %s12, 0
    %p32 = por %p30, %p31
    %p33 = scmp.ne.s32.totalorder %s22, %s25
    %p34 = scmp.eq.s32.totalorder %s17, 1
    %p35 = por %p33, %p34
    %p36 = scmp.ne.s32.totalorder %s25, %s26
    %p37 = scmp.eq.s32.totalorder %s17, 0
    %p38 = por %p36, %p37
    %p39 = scmp.ne.s32.totalorder %s25, %s26
    %p40 = scmp.eq.s32.totalorder %s18, 1
    %p41 = por %p39, %p40
    %p43 = scmp.ne.s32.totalorder %s26, %s42
    %p44 = scmp.eq.s32.totalorder %s18, 0
    %p45 = por %p43, %p44
    %s46 = ssub.s32 %s12, %s19
    %p47 = scmp.eq.s32.totalorder %s46, 0
    %s49 = sadd.s32 %s48, 1
    %s50 = scalar_select %p47, %s48, %s49
    %p53 = pneg %p47
    %p54 = scmp.eq.s32.totalorder %s12, 1
    %p55 = por %p53, %p54
    %p56 = scmp.ne.s32.totalorder %s48, %s51
    %p57 = scmp.eq.s32.totalorder %s12, 0
    %p58 = por %p56, %p57
    %p59 = scmp.ne.s32.totalorder %s48, %s51
    %p60 = scmp.eq.s32.totalorder %s17, 1
    %p61 = por %p59, %p60
    %p62 = scmp.ne.s32.totalorder %s51, %s52
    %p63 = scmp.eq.s32.totalorder %s17, 0
    %p64 = por %p62, %p63
    %p65 = scmp.ne.s32.totalorder %s51, %s52
    %p66 = scmp.eq.s32.totalorder %s18, 1
    %p67 = por %p65, %p66
    %p69 = scmp.ne.s32.totalorder %s52, %s68
    %p70 = scmp.eq.s32.totalorder %s18, 0
    %p71 = por %p69, %p70
    %s72 = ssub.s32 %s12, %s19
    %p73 = scmp.eq.s32.totalorder %s72, 0
    %s75 = sadd.s32 %s74, 1
    %s76 = scalar_select %p73, %s74, %s75
    %p79 = pneg %p73
    %p80 = scmp.eq.s32.totalorder %s12, 1
    %p81 = por %p79, %p80
    %p82 = scmp.ne.s32.totalorder %s74, %s77
    %p83 = scmp.eq.s32.totalorder %s12, 0
    %p84 = por %p82, %p83
    %p85 = scmp.ne.s32.totalorder %s74, %s77
    %p86 = scmp.eq.s32.totalorder %s17, 1
    %p87 = por %p85, %p86
    %p88 = scmp.ne.s32.totalorder %s77, %s78
    %p89 = scmp.eq.s32.totalorder %s17, 0
    %p90 = por %p88, %p89
    %p91 = scmp.ne.s32.totalorder %s77, %s78
    %p92 = scmp.eq.s32.totalorder %s18, 1
    %p93 = por %p91, %p92
    %p95 = scmp.ne.s32.totalorder %s78, %s94
    %p96 = scmp.eq.s32.totalorder %s18, 0
    %p97 = por %p95, %p96
    %s98 = ssub.s32 %s12, %s19
    %p99 = scmp.eq.s32.totalorder %s98, 0
    %s101 = sadd.s32 %s100, 1
    %s102 = scalar_select %p99, %s100, %s101
    %p105 = pneg %p99
    %p106 = scmp.eq.s32.totalorder %s12, 1
    %p107 = por %p105, %p106
    %p108 = scmp.ne.s32.totalorder %s100, %s103
    %p109 = scmp.eq.s32.totalorder %s12, 0
    %p110 = por %p108, %p109
    %p111 = scmp.ne.s32.totalorder %s100, %s103
    %p112 = scmp.eq.s32.totalorder %s17, 1
    %p113 = por %p111, %p112
    %p114 = scmp.ne.s32.totalorder %s103, %s104
    %p115 = scmp.eq.s32.totalorder %s17, 0
    %p116 = por %p114, %p115
    %p117 = scmp.ne.s32.totalorder %s103, %s104
    %p118 = scmp.eq.s32.totalorder %s18, 1
    %p119 = por %p117, %p118
    %p121 = scmp.ne.s32.totalorder %s104, %s120
    %p122 = scmp.eq.s32.totalorder %s18, 0
    %p123 = por %p121, %p122
    %s124 = ssub.s32 %s12, %s19
    %p125 = scmp.eq.s32.totalorder %s124, 0
    %s127 = sadd.s32 %s126, 1
    %s128 = scalar_select %p125, %s126, %s127
    %p131 = pneg %p125
    %p132 = scmp.eq.s32.totalorder %s12, 1
    %p133 = por %p131, %p132
    %p134 = scmp.ne.s32.totalorder %s126, %s129
    %p135 = scmp.eq.s32.totalorder %s12, 0
    %p136 = por %p134, %p135
    %p137 = scmp.ne.s32.totalorder %s126, %s129
    %p138 = scmp.eq.s32.totalorder %s17, 1
    %p139 = por %p137, %p138
    %p140 = scmp.ne.s32.totalorder %s129, %s130
    %p141 = scmp.eq.s32.totalorder %s17, 0
    %p142 = por %p140, %p141
    %p143 = scmp.ne.s32.totalorder %s129, %s130
    %p144 = scmp.eq.s32.totalorder %s18, 1
    %p145 = por %p143, %p144
    %p147 = scmp.ne.s32.totalorder %s130, %s146
    %p148 = scmp.eq.s32.totalorder %s18, 0
    %p149 = por %p147, %p148
    %s150 = ssub.s32 %s12, %s19
    %p151 = scmp.eq.s32.totalorder %s150, 0
    %s153 = sadd.s32 %s152, 1
    %s154 = scalar_select %p151, %s152, %s153
    %p157 = pneg %p151
    %p158 = scmp.eq.s32.totalorder %s12, 1
    %p159 = por %p157, %p158
    %p160 = scmp.ne.s32.totalorder %s152, %s155
    %p161 = scmp.eq.s32.totalorder %s12, 0
    %p162 = por %p160, %p161
    %p163 = scmp.ne.s32.totalorder %s152, %s155
    %p164 = scmp.eq.s32.totalorder %s17, 1
    %p165 = por %p163, %p164
    %p166 = scmp.ne.s32.totalorder %s155, %s156
    %p167 = scmp.eq.s32.totalorder %s17, 0
    %p168 = por %p166, %p167
    %p169 = scmp.ne.s32.totalorder %s155, %s156
    %p170 = scmp.eq.s32.totalorder %s18, 1
    %p171 = por %p169, %p170
    %p173 = scmp.ne.s32.totalorder %s156, %s172
    %p174 = scmp.eq.s32.totalorder %s18, 0
    %p175 = por %p173, %p174
    %p176 = scmp.le.s32.totalorder 1, %s12
    %p177 = scmp.lt.s32.totalorder %s12, 3
    %p178 = pnand %p176, %p177
    %p179 = pneg %p178
    // Predicated region
    $region9: #{tst_encoder_forward.8} parent=5 // pred_check
      _
    $region10: #{tst_encoder_forward.8} parent=5 // pred_check_branch
      %181 = sbr.rel (%p178) target = $region12
    $region11: #{tst_encoder_forward.8} parent=5 // pred_region
      %s182 = ssub.s32 %s12, 1
    $region12: #{tst_encoder_forward.8} parent=5 // pred_fallthru
      _
    %p183 = scmp.lt.s32.totalorder %s12, 2
    // Predicated region
    $region13: #{tst_encoder_forward.8} parent=5 // pred_check
      %p184 = pneg %p183
    $region14: #{tst_encoder_forward.8} parent=5 // pred_check_branch
      %186 = sbr.rel (%p184) target = $region16
    $region15: #{tst_encoder_forward.8} parent=5 // pred_region
      // Predicated region
      $region17: #{tst_encoder_forward.8} parent=15 // pred_check
        %p187 = pneg %p32
      $region18: #{tst_encoder_forward.8} parent=15 // pred_check_branch
        %189 = sbr.rel (%p187) target = $region20
      $region19: #{tst_encoder_forward.8} parent=15 // pred_region
        %p190 = scmp.lt.s32.totalorder %s12, 1
        %s191 = scalar_select %p190, %s12, 1
        %s192 = smul.addr %s191, 2
        %s193 = scalar_lea.vmem %s0, %s192
      $region20: #{tst_encoder_forward.8} parent=15 // pred_fallthru
        _
      // Predicated region
      $region21: #{tst_encoder_forward.8} parent=15 // pred_check
        %p194 = pneg %p58
      $region22: #{tst_encoder_forward.8} parent=15 // pred_check_branch
        %196 = sbr.rel (%p194) target = $region24
      $region23: #{tst_encoder_forward.8} parent=15 // pred_region
        %p197 = scmp.lt.s32.totalorder %s12, 1
        %s198 = scalar_select %p197, %s12, 1
        %s199 = smul.addr %s198, 2
        %s200 = scalar_lea.vmem %s1, %s199
      $region24: #{tst_encoder_forward.8} parent=15 // pred_fallthru
        _
      // Predicated region
      $region25: #{tst_encoder_forward.8} parent=15 // pred_check
        %p201 = pneg %p84
      $region26: #{tst_encoder_forward.8} parent=15 // pred_check_branch
        %203 = sbr.rel (%p201) target = $region28
      $region27: #{tst_encoder_forward.8} parent=15 // pred_region
        %p204 = scmp.lt.s32.totalorder %s12, 1
        %s205 = scalar_select %p204, %s12, 1
        %s206 = smul.addr %s205, 4
        %s207 = scalar_lea.vmem %s2, %s206
      $region28: #{tst_encoder_forward.8} parent=15 // pred_fallthru
        _
      // Predicated region
      $region29: #{tst_encoder_forward.8} parent=15 // pred_check
        %p208 = pneg %p110
      $region30: #{tst_encoder_forward.8} parent=15 // pred_check_branch
        %210 = sbr.rel (%p208) target = $region32
      $region31: #{tst_encoder_forward.8} parent=15 // pred_region
        %p211 = scmp.lt.s32.totalorder %s12, 1
        %s212 = scalar_select %p211, %s12, 1
        %s213 = smul.addr %s212, 2
        %s214 = scalar_lea.vmem %s3, %s213
      $region32: #{tst_encoder_forward.8} parent=15 // pred_fallthru
        _
    $region16: #{tst_encoder_forward.8} parent=5 // pred_fallthru
      _
    %p215 = scmp.le.s32.totalorder 1, %s12
    %p216 = scmp.lt.s32.totalorder %s12, 3
    %p217 = pnand %p215, %p216
    %p218 = pneg %p217
    // Predicated region
    $region33: #{tst_encoder_forward.8} parent=5 // pred_check
      _
    $region34: #{tst_encoder_forward.8} parent=5 // pred_check_branch
      %220 = sbr.rel (%p217) target = $region36
    $region35: #{tst_encoder_forward.8} parent=5 // pred_region
      %s221 = ssub.s32 %s12, 1
      %p222 = scmp.lt.s32.totalorder %s17, 1
      %s223 = scalar_select %p222, %s17, 1
      %s224 = smul.addr %s223, 2
      %s225 = scalar_lea.vmem %s0, %s224
      %p226 = pneg %p38
      %p227 = pneg %p35
      %p228 = scmp.lt.s32.totalorder %s17, 1
      %s229 = scalar_select %p228, %s17, 1
      %s230 = smul.addr %s229, 2
      %s231 = scalar_lea.vmem %s1, %s230
      %p232 = pneg %p64
      %p233 = pneg %p61
      %p234 = scmp.lt.s32.totalorder %s17, 1
      %s235 = scalar_select %p234, %s17, 1
      %s236 = smul.addr %s235, 4
      %s237 = scalar_lea.vmem %s2, %s236
      %p238 = pneg %p90
      %p239 = pneg %p87
      %p240 = scmp.lt.s32.totalorder %s17, 1
      %s241 = scalar_select %p240, %s17, 1
      %s242 = smul.addr %s241, 2
      %s243 = scalar_lea.vmem %s3, %s242
      %p244 = pneg %p116
      %p245 = pneg %p113
      %p246 = pneg %p142
      %p247 = pneg %p139
      %p248 = scmp.lt.s32.totalorder %s17, 1
      %s249 = scalar_select %p248, %s17, 1
      %s250 = smul.addr %s249, 2
      %s251 = scalar_lea.vmem %s4, %s250
      %p252 = pneg %p168
      %p253 = pneg %p165
      %p254 = scmp.lt.s32.totalorder %s17, 1
      %s255 = scalar_select %p254, %s17, 1
      %s256 = smul.addr %s255, 2
      %s257 = scalar_lea.vmem %s5, %s256
      %p258 = scmp.lt.s32.totalorder %s17, 1
      %s259 = scalar_select %p258, %s17, 1
      %s260 = smul.addr %s259, 2
      %s261 = scalar_lea.vmem %s0, %s260
      %p262 = scmp.lt.s32.totalorder %s17, 1
      %s263 = scalar_select %p262, %s17, 1
      %s264 = smul.addr %s263, 2
      %s265 = scalar_lea.vmem %s1, %s264
      %p266 = scmp.lt.s32.totalorder %s17, 1
      %s267 = scalar_select %p266, %s17, 1
      %s268 = smul.addr %s267, 4
      %s269 = scalar_lea.vmem %s2, %s268
      %p270 = scmp.lt.s32.totalorder %s17, 1
      %s271 = scalar_select %p270, %s17, 1
      %s272 = smul.addr %s271, 2
      %s273 = scalar_lea.vmem %s3, %s272
      %p274 = scmp.lt.s32.totalorder %s17, 1
      %s275 = scalar_select %p274, %s17, 1
      %s276 = smul.addr %s275, 2
      %s277 = scalar_lea.vmem %s4, %s276
      %p278 = scmp.lt.s32.totalorder %s17, 1
      %s279 = scalar_select %p278, %s17, 1
      %s280 = smul.addr %s279, 2
      %s281 = scalar_lea.vmem %s5, %s280
      %v282 = vld [vmem:[%s261] sm:$0x3]
      %v283 = vld [vmem:[%s265] sm:$0x3]
      %v284 = vld [vmem:[%s269] sm:$0x7]
      %v285 = vld [vmem:[%s273] sm:$0x3]
      %vm286 = vcmask 1041408
      %v287 = vsel %vm286, %v282, 0.0
      %v288 = vrot.slane %v287, 4
      %v289 = vadd.f32 %v287, %v288
      %v290 = vrot.slane %v289, 2
      %v291 = vadd.f32 %v289, %v290
      %v292 = vrot.slane %v291, 1
      %v293 = vadd.f32 %v291, %v292
      %v294 = vrcp.pop 2.0
      %v295 = vmul.f32 %v293, %v294
      %v296 = vsel %vm286, %v283, 0.0
      %v297 = vrot.slane %v296, 4
      %v298 = vadd.f32 %v296, %v297
      %v299 = vrot.slane %v298, 2
      %v300 = vadd.f32 %v298, %v299
      %v301 = vrot.slane %v300, 1
      %v302 = vadd.f32 %v300, %v301
      %v303 = vmul.f32 %v302, %v294
      %v304 = vsub.f32 %v282, %v295
      %v305 = vsub.f32 %v283, %v303
      %v306 = vmul.f32 %v304, %v304
      %v307 = vsel %vm286, %v306, 0.0
      %v308 = vrot.slane %v307, 4
      %v309 = vadd.f32 %v307, %v308
      %v310 = vrot.slane %v309, 2
      %v311 = vadd.f32 %v309, %v310
      %v312 = vrot.slane %v311, 1
      %v313 = vadd.f32 %v311, %v312
      %v314 = vmul.f32 %v313, %v294
      %v315 = vadd.f32 %v314, 1e-05
      %v316 = vmul.f32 %v305, %v305
      %v317 = vsel %vm286, %v316, 0.0
      %v318 = vrot.slane %v317, 4
      %v319 = vadd.f32 %v317, %v318
      %v320 = vrot.slane %v319, 2
      %v321 = vadd.f32 %v319, %v320
      %v322 = vrot.slane %v321, 1
      %v323 = vadd.f32 %v321, %v322
      %v324 = vmul.f32 %v323, %v294
      %v325 = vadd.f32 %v324, 1e-05
      %v326 = vmul.f32 %v304, %v305
      %v327 = vsel %vm286, %v326, 0.0
      %v328 = vrot.slane %v327, 4
      %v329 = vadd.f32 %v327, %v328
      %v330 = vrot.slane %v329, 2
      %v331 = vadd.f32 %v329, %v330
      %v332 = vrot.slane %v331, 1
      %v333 = vadd.f32 %v331, %v332
      %v334 = vmul.f32 %v333, %v294
      %v335 = vmul.f32 %v315, %v325
      %v336 = vmul.f32 %v334, %v334
      %v337 = vsub.f32 %v335, %v336
      %v338 = vrsqrt.pop %v337
      %v339 = vmul.f32 %v337, %v338
      %vm340 = vcmp.eq.f32.partialorder %v337, inf
      %v341 = vsel %vm340, %v337, %v339
      %vm342 = vcmp.eq.f32.partialorder %v337, 0.0
      %v343 = vand.u32 %v337, 2147483648
      %v344 = vsel %vm342, %v343, %v341
      %v345 = vadd.f32 %v325, %v315
      %v346 = vmul.f32 %v344, 2.0
      %v347 = vadd.f32 %v345, %v346
      %v348 = vrsqrt.pop %v347
      %v349 = vmul.f32 %v347, %v348
      %vm350 = vcmp.eq.f32.partialorder %v347, inf
      %v351 = vsel %vm350, %v347, %v349
      %vm352 = vcmp.eq.f32.partialorder %v347, 0.0
      %v353 = vand.u32 %v347, 2147483648
      %v354 = vsel %vm352, %v353, %v351
      %v355 = vmul.f32 %v344, %v354
      %v356 = vrcp.pop %v355
      %v357 = vadd.f32 %v325, %v344
      %v358 = vmul.f32 %v357, %v356
      %v359 = vadd.f32 %v315, %v344
      %v360 = vmul.f32 %v359, %v356
      %v361 = vsub.f32 0.0, %v334
      %v362 = vmul.f32 %v361, %v356
      %v363 = vmul.f32 %v358, %v304
      %v364 = vmul.f32 %v362, %v305
      %v365 = vadd.f32 %v363, %v364
      %v366 = vmul.f32 %v360, %v305
      %v367 = vmul.f32 %v362, %v304
      %v368 = vadd.f32 %v366, %v367
      %v369 = vlaneseq
      %v370 = vshrl.u32 %v369, 7
      %v371 = vsub.s32 0, %v370
      %v372 = vrot.slane %v284, %v371
      %v373 = vmul.f32 %v372, %v365
      %v374 = vlaneseq
      %v375 = vshrl.u32 %v374, 7
      %v376 = vsub.s32 2, %v375
      %v377 = vrot.slane %v284, %v376
      %v378 = vmul.f32 %v377, %v368
      %v379 = vadd.f32 %v373, %v378
      %v380 = vlaneseq
      %v381 = vshrl.u32 %v380, 7
      %v382 = vsub.s32 0, %v381
      %v383 = vrot.slane %v285, %v382
      %v384 = vadd.f32 %v379, %v383
      %v385 = vmul.f32 %v377, %v365
      %v386 = vlaneseq
      %v387 = vshrl.u32 %v386, 7
      %v388 = vsub.s32 1, %v387
      %v389 = vrot.slane %v284, %v388
      %v390 = vmul.f32 %v389, %v368
      %v391 = vadd.f32 %v385, %v390
      %v392 = vlaneseq
      %v393 = vshrl.u32 %v392, 7
      %v394 = vsub.s32 1, %v393
      %v395 = vrot.slane %v285, %v394
      %v396 = vadd.f32 %v391, %v395
      %397 = vst [vmem:[%s277] sm:$0x3] %v384
      %398 = vst [vmem:[%s281] sm:$0x3] %v396
      %p399 = scmp.lt.s32.totalorder %s17, 1
      %s400 = scalar_select %p399, %s17, 1
      %s401 = smul.addr %s400, 2
      %s402 = scalar_lea.vmem %s4, %s401
      %p403 = scmp.lt.s32.totalorder %s17, 1
      %s404 = scalar_select %p403, %s17, 1
      %s405 = smul.addr %s404, 2
      %s406 = scalar_lea.vmem %s5, %s405
      // Predicated region
      $region37: #{tst_encoder_forward.8} parent=35 // pred_check
        %p407 = pneg %p139
      $region38: #{tst_encoder_forward.8} parent=35 // pred_check_branch
        %409 = sbr.rel (%p407) target = $region40
      $region39: #{tst_encoder_forward.8} parent=35 // pred_region
        _
      $region40: #{tst_encoder_forward.8} parent=35 // pred_fallthru
        _
      // Predicated region
      $region41: #{tst_encoder_forward.8} parent=35 // pred_check
        %p410 = pneg %p165
      $region42: #{tst_encoder_forward.8} parent=35 // pred_check_branch
        %412 = sbr.rel (%p410) target = $region44
      $region43: #{tst_encoder_forward.8} parent=35 // pred_region
        _
      $region44: #{tst_encoder_forward.8} parent=35 // pred_fallthru
        _
    $region36: #{tst_encoder_forward.8} parent=5 // pred_fallthru
      _
    %p413 = scmp.le.s32.totalorder 2, %s12
    // Predicated region
    $region45: #{tst_encoder_forward.8} parent=5 // pred_check
      %p414 = pneg %p413
    $region46: #{tst_encoder_forward.8} parent=5 // pred_check_branch
      %416 = sbr.rel (%p414) target = $region48
    $region47: #{tst_encoder_forward.8} parent=5 // pred_region
      %s417 = ssub.s32 %s12, 2
      // Predicated region
      $region49: #{tst_encoder_forward.8} parent=47 // pred_check
        %p418 = pneg %p145
      $region50: #{tst_encoder_forward.8} parent=47 // pred_check_branch
        %420 = sbr.rel (%p418) target = $region52
      $region51: #{tst_encoder_forward.8} parent=47 // pred_region
        %p421 = scmp.lt.s32.totalorder %s18, 1
        %s422 = scalar_select %p421, %s18, 1
        %s423 = smul.addr %s422, 2
        %s424 = scalar_lea.vmem %s4, %s423
      $region52: #{tst_encoder_forward.8} parent=47 // pred_fallthru
        _
      // Predicated region
      $region53: #{tst_encoder_forward.8} parent=47 // pred_check
        %p425 = pneg %p171
      $region54: #{tst_encoder_forward.8} parent=47 // pred_check_branch
        %427 = sbr.rel (%p425) target = $region56
      $region55: #{tst_encoder_forward.8} parent=47 // pred_region
        %p428 = scmp.lt.s32.totalorder %s18, 1
        %s429 = scalar_select %p428, %s18, 1
        %s430 = smul.addr %s429, 2
        %s431 = scalar_lea.vmem %s5, %s430
      $region56: #{tst_encoder_forward.8} parent=47 // pred_fallthru
        _
    $region48: #{tst_encoder_forward.8} parent=5 // pred_fallthru
      _
  $region6: #{tst_encoder_forward.8} parent=0 // loop_footer
    %s16 = sadd.s32 1, %s12
  $region7: #{tst_encoder_forward.8} parent=0 // loop_footer_branch
    %11 = sbr.rel target = $region3
  $region8: #{tst_encoder_forward.8} parent=0 // loop_exit
    _

// kernel: tst_encoder_forward.7
$region0: #{tst_encoder_forward.7}
  #allocation0 [shape = 'u32[]', space=smem, size = 0x4, offset = 0x4, fixed_abs, tag = 'smem constant byte address 0x4 - core index']
  #allocation1 [shape = 'u32[144,128]{1,0:T(1,128)}', space=vmem, size = 0x12000, scoped, tag = 'internal scratch']
  %s0 = inlined_call_operand.vmem [shape: f32[16,32], index: 0, kind: input, shape index: {}]
  %s1 = inlined_call_operand.vmem [shape: f32[16,32], index: 1, kind: input, shape index: {}]
  %s2 = inlined_call_operand.vmem [shape: bf16[32,64], index: 2, kind: input, shape index: {}]
  %s3 = inlined_call_operand.vmem [shape: bf16[32,64], index: 3, kind: input, shape index: {}]
  %s4 = inlined_call_operand.vmem [shape: bf16[32,64], index: 4, kind: input, shape index: {}]
  %s5 = inlined_call_operand.vmem [shape: f32[1,64], index: 5, kind: input, shape index: {}]
  %s6 = inlined_call_operand.vmem [shape: f32[1,64], index: 6, kind: input, shape index: {}]
  %s7 = inlined_call_operand.vmem [shape: bf16[64,32], index: 7, kind: input, shape index: {}]
  %s8 = inlined_call_operand.vmem [shape: bf16[64,32], index: 8, kind: input, shape index: {}]
  %s9 = inlined_call_operand.vmem [shape: bf16[64,32], index: 9, kind: input, shape index: {}]
  %s10 = inlined_call_operand.vmem [shape: f32[1,32], index: 10, kind: input, shape index: {}]
  %s11 = inlined_call_operand.vmem [shape: f32[1,32], index: 11, kind: input, shape index: {}]
  %s12 = inlined_call_operand.vmem [shape: f32[16,32], index: 12, kind: output, shape index: {0}]
  %s13 = inlined_call_operand.vmem [shape: f32[16,32], index: 13, kind: output, shape index: {1}]
  %14 = xla_tuple %s12, %s13
  %s15 = sld [smem:[#allocation0]]
  $region89: #{tst_encoder_forward.7} parent=0
    _
  %s17 = ssub.s32 1, %s15
  %s18 = scalar_select 0, %s17, %s15
  loop: start=0, step=1, limit=4
  $region2: #{tst_encoder_forward.7} parent=0 // loop_pre_header
    _
  $region3: #{tst_encoder_forward.7} parent=0 // loop_header
    %s20 = sphi 0, %s24
    %p21 = scmp.ge.s32.totalorder %s20, 4
    %s30 = sphi 0, %s32
    %s33 = sphi 0, %s30
    %s34 = sphi 0, %s33
    %s50 = sphi 0, %s34
    %s56 = sphi 0, %s58
    %s59 = sphi 0, %s56
    %s60 = sphi 0, %s59
    %s76 = sphi 0, %s60
    %s80 = sphi 0, %s80
    %s82 = sphi 0, %s80
    %s83 = sphi 0, %s82
    %s97 = sphi 0, %s83
    %s101 = sphi 0, %s101
    %s103 = sphi 0, %s101
    %s104 = sphi 0, %s103
    %s118 = sphi 0, %s104
    %s122 = sphi 0, %s122
    %s124 = sphi 0, %s122
    %s125 = sphi 0, %s124
    %s139 = sphi 0, %s125
    %s143 = sphi 0, %s143
    %s145 = sphi 0, %s143
    %s146 = sphi 0, %s145
    %s160 = sphi 0, %s146
    %s164 = sphi 0, %s164
    %s166 = sphi 0, %s164
    %s167 = sphi 0, %s166
    %s181 = sphi 0, %s167
    %s185 = sphi 0, %s185
    %s187 = sphi 0, %s185
    %s188 = sphi 0, %s187
    %s202 = sphi 0, %s188
    %s206 = sphi 0, %s206
    %s208 = sphi 0, %s206
    %s209 = sphi 0, %s208
    %s223 = sphi 0, %s209
    %s227 = sphi 0, %s227
    %s229 = sphi 0, %s227
    %s230 = sphi 0, %s229
    %s244 = sphi 0, %s230
    %s248 = sphi 0, %s248
    %s250 = sphi 0, %s248
    %s251 = sphi 0, %s250
    %s265 = sphi 0, %s251
    %s269 = sphi 0, %s269
    %s271 = sphi 0, %s269
    %s272 = sphi 0, %s271
    %s286 = sphi 0, %s272
    %s292 = sphi 0, %s294
    %s295 = sphi 0, %s292
    %s296 = sphi 0, %s295
    %s312 = sphi 0, %s296
    %s318 = sphi 0, %s320
    %s321 = sphi 0, %s318
    %s322 = sphi 0, %s321
    %s338 = sphi 0, %s322
  $region4: #{tst_encoder_forward.7} parent=0 // loop_header_branch
    %23 = sbr.rel (%p21) target = $region8
  $region5: #{tst_encoder_forward.7} parent=0 // loop_body
    %s25 = ssub.s32 %s20, 1
    %s26 = ssub.s32 %s20, 2
    %s27 = sadd.s32 %s20, 1
    %s28 = ssub.s32 %s20, %s27
    %p29 = scmp.eq.s32.totalorder %s28, 0
    %s31 = sadd.s32 %s30, 1
    %s32 = scalar_select %p29, %s30, %s31
    %p35 = pneg %p29
    %p36 = scmp.eq.s32.totalorder %s20, 1
    %p37 = por %p35, %p36
    %p38 = scmp.ne.s32.totalorder %s30, %s33
    %p39 = scmp.eq.s32.totalorder %s20, 0
    %p40 = por %p38, %p39
    %p41 = scmp.ne.s32.totalorder %s30, %s33
    %p42 = scmp.eq.s32.totalorder %s25, 1
    %p43 = por %p41, %p42
    %p44 = scmp.ne.s32.totalorder %s33, %s34
    %p45 = scmp.eq.s32.totalorder %s25, 0
    %p46 = por %p44, %p45
    %p47 = scmp.ne.s32.totalorder %s33, %s34
    %p48 = scmp.eq.s32.totalorder %s26, 1
    %p49 = por %p47, %p48
    %p51 = scmp.ne.s32.totalorder %s34, %s50
    %p52 = scmp.eq.s32.totalorder %s26, 0
    %p53 = por %p51, %p52
    %s54 = ssub.s32 %s20, %s27
    %p55 = scmp.eq.s32.totalorder %s54, 0
    %s57 = sadd.s32 %s56, 1
    %s58 = scalar_select %p55, %s56, %s57
    %p61 = pneg %p55
    %p62 = scmp.eq.s32.totalorder %s20, 1
    %p63 = por %p61, %p62
    %p64 = scmp.ne.s32.totalorder %s56, %s59
    %p65 = scmp.eq.s32.totalorder %s20, 0
    %p66 = por %p64, %p65
    %p67 = scmp.ne.s32.totalorder %s56, %s59
    %p68 = scmp.eq.s32.totalorder %s25, 1
    %p69 = por %p67, %p68
    %p70 = scmp.ne.s32.totalorder %s59, %s60
    %p71 = scmp.eq.s32.totalorder %s25, 0
    %p72 = por %p70, %p71
    %p73 = scmp.ne.s32.totalorder %s59, %s60
    %p74 = scmp.eq.s32.totalorder %s26, 1
    %p75 = por %p73, %p74
    %p77 = scmp.ne.s32.totalorder %s60, %s76
    %p78 = scmp.eq.s32.totalorder %s26, 0
    %p79 = por %p77, %p78
    %s81 = sadd.s32 %s80, 1
    %p84 = scmp.eq.s32.totalorder %s20, 1
    %p85 = scmp.ne.s32.totalorder %s80, %s82
    %p86 = scmp.eq.s32.totalorder %s20, 0
    %p87 = por %p85, %p86
    %p88 = scmp.ne.s32.totalorder %s80, %s82
    %p89 = scmp.eq.s32.totalorder %s25, 1
    %p90 = por %p88, %p89
    %p91 = scmp.ne.s32.totalorder %s82, %s83
    %p92 = scmp.eq.s32.totalorder %s25, 0
    %p93 = por %p91, %p92
    %p94 = scmp.ne.s32.totalorder %s82, %s83
    %p95 = scmp.eq.s32.totalorder %s26, 1
    %p96 = por %p94, %p95
    %p98 = scmp.ne.s32.totalorder %s83, %s97
    %p99 = scmp.eq.s32.totalorder %s26, 0
    %p100 = por %p98, %p99
    %s102 = sadd.s32 %s101, 1
    %p105 = scmp.eq.s32.totalorder %s20, 1
    %p106 = scmp.ne.s32.totalorder %s101, %s103
    %p107 = scmp.eq.s32.totalorder %s20, 0
    %p108 = por %p106, %p107
    %p109 = scmp.ne.s32.totalorder %s101, %s103
    %p110 = scmp.eq.s32.totalorder %s25, 1
    %p111 = por %p109, %p110
    %p112 = scmp.ne.s32.totalorder %s103, %s104
    %p113 = scmp.eq.s32.totalorder %s25, 0
    %p114 = por %p112, %p113
    %p115 = scmp.ne.s32.totalorder %s103, %s104
    %p116 = scmp.eq.s32.totalorder %s26, 1
    %p117 = por %p115, %p116
    %p119 = scmp.ne.s32.totalorder %s104, %s118
    %p120 = scmp.eq.s32.totalorder %s26, 0
    %p121 = por %p119, %p120
    %s123 = sadd.s32 %s122, 1
    %p126 = scmp.eq.s32.totalorder %s20, 1
    %p127 = scmp.ne.s32.totalorder %s122, %s124
    %p128 = scmp.eq.s32.totalorder %s20, 0
    %p129 = por %p127, %p128
    %p130 = scmp.ne.s32.totalorder %s122, %s124
    %p131 = scmp.eq.s32.totalorder %s25, 1
    %p132 = por %p130, %p131
    %p133 = scmp.ne.s32.totalorder %s124, %s125
    %p134 = scmp.eq.s32.totalorder %s25, 0
    %p135 = por %p133, %p134
    %p136 = scmp.ne.s32.totalorder %s124, %s125
    %p137 = scmp.eq.s32.totalorder %s26, 1
    %p138 = por %p136, %p137
    %p140 = scmp.ne.s32.totalorder %s125, %s139
    %p141 = scmp.eq.s32.totalorder %s26, 0
    %p142 = por %p140, %p141
    %s144 = sadd.s32 %s143, 1
    %p147 = scmp.eq.s32.totalorder %s20, 1
    %p148 = scmp.ne.s32.totalorder %s143, %s145
    %p149 = scmp.eq.s32.totalorder %s20, 0
    %p150 = por %p148, %p149
    %p151 = scmp.ne.s32.totalorder %s143, %s145
    %p152 = scmp.eq.s32.totalorder %s25, 1
    %p153 = por %p151, %p152
    %p154 = scmp.ne.s32.totalorder %s145, %s146
    %p155 = scmp.eq.s32.totalorder %s25, 0
    %p156 = por %p154, %p155
    %p157 = scmp.ne.s32.totalorder %s145, %s146
    %p158 = scmp.eq.s32.totalorder %s26, 1
    %p159 = por %p157, %p158
    %p161 = scmp.ne.s32.totalorder %s146, %s160
    %p162 = scmp.eq.s32.totalorder %s26, 0
    %p163 = por %p161, %p162
    %s165 = sadd.s32 %s164, 1
    %p168 = scmp.eq.s32.totalorder %s20, 1
    %p169 = scmp.ne.s32.totalorder %s164, %s166
    %p170 = scmp.eq.s32.totalorder %s20, 0
    %p171 = por %p169, %p170
    %p172 = scmp.ne.s32.totalorder %s164, %s166
    %p173 = scmp.eq.s32.totalorder %s25, 1
    %p174 = por %p172, %p173
    %p175 = scmp.ne.s32.totalorder %s166, %s167
    %p176 = scmp.eq.s32.totalorder %s25, 0
    %p177 = por %p175, %p176
    %p178 = scmp.ne.s32.totalorder %s166, %s167
    %p179 = scmp.eq.s32.totalorder %s26, 1
    %p180 = por %p178, %p179
    %p182 = scmp.ne.s32.totalorder %s167, %s181
    %p183 = scmp.eq.s32.totalorder %s26, 0
    %p184 = por %p182, %p183
    %s186 = sadd.s32 %s185, 1
    %p189 = scmp.eq.s32.totalorder %s20, 1
    %p190 = scmp.ne.s32.totalorder %s185, %s187
    %p191 = scmp.eq.s32.totalorder %s20, 0
    %p192 = por %p190, %p191
    %p193 = scmp.ne.s32.totalorder %s185, %s187
    %p194 = scmp.eq.s32.totalorder %s25, 1
    %p195 = por %p193, %p194
    %p196 = scmp.ne.s32.totalorder %s187, %s188
    %p197 = scmp.eq.s32.totalorder %s25, 0
    %p198 = por %p196, %p197
    %p199 = scmp.ne.s32.totalorder %s187, %s188
    %p200 = scmp.eq.s32.totalorder %s26, 1
    %p201 = por %p199, %p200
    %p203 = scmp.ne.s32.totalorder %s188, %s202
    %p204 = scmp.eq.s32.totalorder %s26, 0
    %p205 = por %p203, %p204
    %s207 = sadd.s32 %s206, 1
    %p210 = scmp.eq.s32.totalorder %s20, 1
    %p211 = scmp.ne.s32.totalorder %s206, %s208
    %p212 = scmp.eq.s32.totalorder %s20, 0
    %p213 = por %p211, %p212
    %p214 = scmp.ne.s32.totalorder %s206, %s208
    %p215 = scmp.eq.s32.totalorder %s25, 1
    %p216 = por %p214, %p215
    %p217 = scmp.ne.s32.totalorder %s208, %s209
    %p218 = scmp.eq.s32.totalorder %s25, 0
    %p219 = por %p217, %p218
    %p220 = scmp.ne.s32.totalorder %s208, %s209
    %p221 = scmp.eq.s32.totalorder %s26, 1
    %p222 = por %p220, %p221
    %p224 = scmp.ne.s32.totalorder %s209, %s223
    %p225 = scmp.eq.s32.totalorder %s26, 0
    %p226 = por %p224, %p225
    %s228 = sadd.s32 %s227, 1
    %p231 = scmp.eq.s32.totalorder %s20, 1
    %p232 = scmp.ne.s32.totalorder %s227, %s229
    %p233 = scmp.eq.s32.totalorder %s20, 0
    %p234 = por %p232, %p233
    %p235 = scmp.ne.s32.totalorder %s227, %s229
    %p236 = scmp.eq.s32.totalorder %s25, 1
    %p237 = por %p235, %p236
    %p238 = scmp.ne.s32.totalorder %s229, %s230
    %p239 = scmp.eq.s32.totalorder %s25, 0
    %p240 = por %p238, %p239
    %p241 = scmp.ne.s32.totalorder %s229, %s230
    %p242 = scmp.eq.s32.totalorder %s26, 1
    %p243 = por %p241, %p242
    %p245 = scmp.ne.s32.totalorder %s230, %s244
    %p246 = scmp.eq.s32.totalorder %s26, 0
    %p247 = por %p245, %p246
    %s249 = sadd.s32 %s248, 1
    %p252 = scmp.eq.s32.totalorder %s20, 1
    %p253 = scmp.ne.s32.totalorder %s248, %s250
    %p254 = scmp.eq.s32.totalorder %s20, 0
    %p255 = por %p253, %p254
    %p256 = scmp.ne.s32.totalorder %s248, %s250
    %p257 = scmp.eq.s32.totalorder %s25, 1
    %p258 = por %p256, %p257
    %p259 = scmp.ne.s32.totalorder %s250, %s251
    %p260 = scmp.eq.s32.totalorder %s25, 0
    %p261 = por %p259, %p260
    %p262 = scmp.ne.s32.totalorder %s250, %s251
    %p263 = scmp.eq.s32.totalorder %s26, 1
    %p264 = por %p262, %p263
    %p266 = scmp.ne.s32.totalorder %s251, %s265
    %p267 = scmp.eq.s32.totalorder %s26, 0
    %p268 = por %p266, %p267
    %s270 = sadd.s32 %s269, 1
    %p273 = scmp.eq.s32.totalorder %s20, 1
    %p274 = scmp.ne.s32.totalorder %s269, %s271
    %p275 = scmp.eq.s32.totalorder %s20, 0
    %p276 = por %p274, %p275
    %p277 = scmp.ne.s32.totalorder %s269, %s271
    %p278 = scmp.eq.s32.totalorder %s25, 1
    %p279 = por %p277, %p278
    %p280 = scmp.ne.s32.totalorder %s271, %s272
    %p281 = scmp.eq.s32.totalorder %s25, 0
    %p282 = por %p280, %p281
    %p283 = scmp.ne.s32.totalorder %s271, %s272
    %p284 = scmp.eq.s32.totalorder %s26, 1
    %p285 = por %p283, %p284
    %p287 = scmp.ne.s32.totalorder %s272, %s286
    %p288 = scmp.eq.s32.totalorder %s26, 0
    %p289 = por %p287, %p288
    %s290 = ssub.s32 %s20, %s27
    %p291 = scmp.eq.s32.totalorder %s290, 0
    %s293 = sadd.s32 %s292, 1
    %s294 = scalar_select %p291, %s292, %s293
    %p297 = pneg %p291
    %p298 = scmp.eq.s32.totalorder %s20, 1
    %p299 = por %p297, %p298
    %p300 = scmp.ne.s32.totalorder %s292, %s295
    %p301 = scmp.eq.s32.totalorder %s20, 0
    %p302 = por %p300, %p301
    %p303 = scmp.ne.s32.totalorder %s292, %s295
    %p304 = scmp.eq.s32.totalorder %s25, 1
    %p305 = por %p303, %p304
    %p306 = scmp.ne.s32.totalorder %s295, %s296
    %p307 = scmp.eq.s32.totalorder %s25, 0
    %p308 = por %p306, %p307
    %p309 = scmp.ne.s32.totalorder %s295, %s296
    %p310 = scmp.eq.s32.totalorder %s26, 1
    %p311 = por %p309, %p310
    %p313 = scmp.ne.s32.totalorder %s296, %s312
    %p314 = scmp.eq.s32.totalorder %s26, 0
    %p315 = por %p313, %p314
    %s316 = ssub.s32 %s20, %s27
    %p317 = scmp.eq.s32.totalorder %s316, 0
    %s319 = sadd.s32 %s318, 1
    %s320 = scalar_select %p317, %s318, %s319
    %p323 = pneg %p317
    %p324 = scmp.eq.s32.totalorder %s20, 1
    %p325 = por %p323, %p324
    %p326 = scmp.ne.s32.totalorder %s318, %s321
    %p327 = scmp.eq.s32.totalorder %s20, 0
    %p328 = por %p326, %p327
    %p329 = scmp.ne.s32.totalorder %s318, %s321
    %p330 = scmp.eq.s32.totalorder %s25, 1
    %p331 = por %p329, %p330
    %p332 = scmp.ne.s32.totalorder %s321, %s322
    %p333 = scmp.eq.s32.totalorder %s25, 0
    %p334 = por %p332, %p333
    %p335 = scmp.ne.s32.totalorder %s321, %s322
    %p336 = scmp.eq.s32.totalorder %s26, 1
    %p337 = por %p335, %p336
    %p339 = scmp.ne.s32.totalorder %s322, %s338
    %p340 = scmp.eq.s32.totalorder %s26, 0
    %p341 = por %p339, %p340
    %p342 = scmp.le.s32.totalorder 1, %s20
    %p343 = scmp.lt.s32.totalorder %s20, 3
    %p344 = pnand %p342, %p343
    %p345 = pneg %p344
    // Predicated region
    $region9: #{tst_encoder_forward.7} parent=5 // pred_check
      _
    $region10: #{tst_encoder_forward.7} parent=5 // pred_check_branch
      %347 = sbr.rel (%p344) target = $region12
    $region11: #{tst_encoder_forward.7} parent=5 // pred_region
      %s348 = ssub.s32 %s20, 1
      // Predicated region
      $region13: #{tst_encoder_forward.7} parent=11 // pred_check
        %p349 = pneg %p93
      $region14: #{tst_encoder_forward.7} parent=11 // pred_check_branch
        %351 = sbr.rel (%p349) target = $region16
      $region15: #{tst_encoder_forward.7} parent=11 // pred_region
        _
      $region16: #{tst_encoder_forward.7} parent=11 // pred_fallthru
        _
      // Predicated region
      $region17: #{tst_encoder_forward.7} parent=11 // pred_check
        %p352 = pneg %p114
      $region18: #{tst_encoder_forward.7} parent=11 // pred_check_branch
        %354 = sbr.rel (%p352) target = $region20
      $region19: #{tst_encoder_forward.7} parent=11 // pred_region
        _
      $region20: #{tst_encoder_forward.7} parent=11 // pred_fallthru
        _
      // Predicated region
      $region21: #{tst_encoder_forward.7} parent=11 // pred_check
        %p355 = pneg %p135
      $region22: #{tst_encoder_forward.7} parent=11 // pred_check_branch
        %357 = sbr.rel (%p355) target = $region24
      $region23: #{tst_encoder_forward.7} parent=11 // pred_region
        _
      $region24: #{tst_encoder_forward.7} parent=11 // pred_fallthru
        _
      // Predicated region
      $region25: #{tst_encoder_forward.7} parent=11 // pred_check
        %p358 = pneg %p156
      $region26: #{tst_encoder_forward.7} parent=11 // pred_check_branch
        %360 = sbr.rel (%p358) target = $region28
      $region27: #{tst_encoder_forward.7} parent=11 // pred_region
        _
      $region28: #{tst_encoder_forward.7} parent=11 // pred_fallthru
        _
      // Predicated region
      $region29: #{tst_encoder_forward.7} parent=11 // pred_check
        %p361 = pneg %p177
      $region30: #{tst_encoder_forward.7} parent=11 // pred_check_branch
        %363 = sbr.rel (%p361) target = $region32
      $region31: #{tst_encoder_forward.7} parent=11 // pred_region
        _
      $region32: #{tst_encoder_forward.7} parent=11 // pred_fallthru
        _
      // Predicated region
      $region33: #{tst_encoder_forward.7} parent=11 // pred_check
        %p364 = pneg %p198
      $region34: #{tst_encoder_forward.7} parent=11 // pred_check_branch
        %366 = sbr.rel (%p364) target = $region36
      $region35: #{tst_encoder_forward.7} parent=11 // pred_region
        _
      $region36: #{tst_encoder_forward.7} parent=11 // pred_fallthru
        _
      // Predicated region
      $region37: #{tst_encoder_forward.7} parent=11 // pred_check
        %p367 = pneg %p219
      $region38: #{tst_encoder_forward.7} parent=11 // pred_check_branch
        %369 = sbr.rel (%p367) target = $region40
      $region39: #{tst_encoder_forward.7} parent=11 // pred_region
        _
      $region40: #{tst_encoder_forward.7} parent=11 // pred_fallthru
        _
      // Predicated region
      $region41: #{tst_encoder_forward.7} parent=11 // pred_check
        %p370 = pneg %p240
      $region42: #{tst_encoder_forward.7} parent=11 // pred_check_branch
        %372 = sbr.rel (%p370) target = $region44
      $region43: #{tst_encoder_forward.7} parent=11 // pred_region
        _
      $region44: #{tst_encoder_forward.7} parent=11 // pred_fallthru
        _
      // Predicated region
      $region45: #{tst_encoder_forward.7} parent=11 // pred_check
        %p373 = pneg %p261
      $region46: #{tst_encoder_forward.7} parent=11 // pred_check_branch
        %375 = sbr.rel (%p373) target = $region48
      $region47: #{tst_encoder_forward.7} parent=11 // pred_region
        _
      $region48: #{tst_encoder_forward.7} parent=11 // pred_fallthru
        _
      // Predicated region
      $region49: #{tst_encoder_forward.7} parent=11 // pred_check
        %p376 = pneg %p282
      $region50: #{tst_encoder_forward.7} parent=11 // pred_check_branch
        %378 = sbr.rel (%p376) target = $region52
      $region51: #{tst_encoder_forward.7} parent=11 // pred_region
        _
      $region52: #{tst_encoder_forward.7} parent=11 // pred_fallthru
        _
    $region12: #{tst_encoder_forward.7} parent=5 // pred_fallthru
      _
    %p379 = scmp.lt.s32.totalorder %s20, 2
    // Predicated region
    $region53: #{tst_encoder_forward.7} parent=5 // pred_check
      %p380 = pneg %p379
    $region54: #{tst_encoder_forward.7} parent=5 // pred_check_branch
      %382 = sbr.rel (%p380) target = $region56
    $region55: #{tst_encoder_forward.7} parent=5 // pred_region
      // Predicated region
      $region57: #{tst_encoder_forward.7} parent=55 // pred_check
        %p383 = pneg %p40
      $region58: #{tst_encoder_forward.7} parent=55 // pred_check_branch
        %385 = sbr.rel (%p383) target = $region60
      $region59: #{tst_encoder_forward.7} parent=55 // pred_region
        %p386 = scmp.lt.s32.totalorder %s20, 1
        %s387 = scalar_select %p386, %s20, 1
        %s388 = smul.addr %s387, 8
        %s389 = scalar_lea.vmem %s0, %s388
      $region60: #{tst_encoder_forward.7} parent=55 // pred_fallthru
        _
      // Predicated region
      $region61: #{tst_encoder_forward.7} parent=55 // pred_check
        %p390 = pneg %p66
      $region62: #{tst_encoder_forward.7} parent=55 // pred_check_branch
        %392 = sbr.rel (%p390) target = $region64
      $region63: #{tst_encoder_forward.7} parent=55 // pred_region
        %p393 = scmp.lt.s32.totalorder %s20, 1
        %s394 = scalar_select %p393, %s20, 1
        %s395 = smul.addr %s394, 8
        %s396 = scalar_lea.vmem %s1, %s395
      $region64: #{tst_encoder_forward.7} parent=55 // pred_fallthru
        _
    $region56: #{tst_encoder_forward.7} parent=5 // pred_fallthru
      _
    %p397 = scmp.le.s32.totalorder 1, %s20
    %p398 = scmp.lt.s32.totalorder %s20, 3
    %p399 = pnand %p397, %p398
    %p400 = pneg %p399
    // Predicated region
    $region65: #{tst_encoder_forward.7} parent=5 // pred_check
      _
    $region66: #{tst_encoder_forward.7} parent=5 // pred_check_branch
      %402 = sbr.rel (%p399) target = $region68
    $region67: #{tst_encoder_forward.7} parent=5 // pred_region
      %s403 = ssub.s32 %s20, 1
      %p404 = scmp.lt.s32.totalorder %s25, 1
      %s405 = scalar_select %p404, %s25, 1
      %s406 = smul.addr %s405, 8
      %s407 = scalar_lea.vmem %s0, %s406
      %p408 = pneg %p46
      %p409 = pneg %p43
      %p410 = scmp.lt.s32.totalorder %s25, 1
      %s411 = scalar_select %p410, %s25, 1
      %s412 = smul.addr %s411, 8
      %s413 = scalar_lea.vmem %s1, %s412
      %p414 = pneg %p72
      %p415 = pneg %p69
      %p416 = pneg %p93
      %p417 = pneg %p90
      %p418 = pneg %p114
      %p419 = pneg %p111
      %p420 = pneg %p135
      %p421 = pneg %p132
      %p422 = pneg %p156
      %p423 = pneg %p153
      %p424 = pneg %p177
      %p425 = pneg %p174
      %p426 = pneg %p198
      %p427 = pneg %p195
      %p428 = pneg %p219
      %p429 = pneg %p216
      %p430 = pneg %p240
      %p431 = pneg %p237
      %p432 = pneg %p261
      %p433 = pneg %p258
      %p434 = pneg %p282
      %p435 = pneg %p279
      %p436 = pneg %p308
      %p437 = pneg %p305
      %p438 = scmp.lt.s32.totalorder %s25, 1
      %s439 = scalar_select %p438, %s25, 1
      %s440 = smul.addr %s439, 8
      %s441 = scalar_lea.vmem %s12, %s440
      %p442 = pneg %p334
      %p443 = pneg %p331
      %p444 = scmp.lt.s32.totalorder %s25, 1
      %s445 = scalar_select %p444, %s25, 1
      %s446 = smul.addr %s445, 8
      %s447 = scalar_lea.vmem %s13, %s446
      %p448 = scmp.lt.s32.totalorder %s25, 1
      %s449 = scalar_select %p448, %s25, 1
      %s450 = smul.addr %s449, 8
      %s451 = scalar_lea.vmem %s0, %s450
      %p452 = scmp.lt.s32.totalorder %s25, 1
      %s453 = scalar_select %p452, %s25, 1
      %s454 = smul.addr %s453, 8
      %s455 = scalar_lea.vmem %s1, %s454
      %p456 = scmp.lt.s32.totalorder %s25, 1
      %s457 = scalar_select %p456, %s25, 1
      %s458 = smul.addr %s457, 8
      %s459 = scalar_lea.vmem %s12, %s458
      %p460 = scmp.lt.s32.totalorder %s25, 1
      %s461 = scalar_select %p460, %s25, 1
      %s462 = smul.addr %s461, 8
      %s463 = scalar_lea.vmem %s13, %s462
      %v465 = vld [vmem:[%s451] sm:$0xff]
      %v466 = vld [vmem:[%s455] sm:$0xff]
      %v467 = vpack.c.bf16 %v465, %v465
      %v468 = vpack.c.bf16 %v466, %v466
      %v469 = vadd.f32 %v465, %v466
      %v470 = vpack.c.bf16 %v469, %v469
      %v471 = vld [vmem:[%s2] sm:$0xf]
      %v472 = vld [vmem:[%s2 + $0x4] sm:$0xf]
      %v473 = vld [vmem:[%s2 + $0x8] sm:$0xf]
      %v474 = vld [vmem:[%s2 + $0xc] sm:$0xf]
      %v479 = vunpack.c.l.b16 %v471
      %v480 = vunpack.c.l.b16 %v472
      %v481 = vunpack.c.l.b16 %v473
      %v482 = vunpack.c.l.b16 %v474
      %v483 = vpack.c.b16 %v480, %v479
      %v484 = vpack.c.b16 %v482, %v481
      %vm487 = vcmask 261120
      %v489 = vsel %vm487, %v467, 0
      %491 = vmatprep.subr.bf16.mxu0 0
      %492 = vmatpush1.bf16.msra.mxu0 %v483
      %493 = vmatprep.subr.bf16.mxu0 0
      %494 = vmatpush1.bf16.msra.mxu0 %v484
      %495 = vmatprep.subr.bf16.mxu0 0
      %496 = vmatpush1.bf16.msra.mxu0 0
      %497 = vmatprep.subr.bf16.mxu0 0
      %498 = vmatpush1.bf16.msra.mxu0 0
      %499 = vmatprep.subr.bf16.mxu0 0
      %500 = vmatpush1.bf16.msra.mxu0 0
      %501 = vmatprep.subr.bf16.mxu0 0
      %502 = vmatpush1.bf16.msra.mxu0 0
      %503 = vmatprep.subr.bf16.mxu0 0
      %504 = vmatpush1.bf16.msra.mxu0 0
      %505 = vmatprep.subr.bf16.mxu0 0
      %506 = vmatpush1.bf16.msra.mxu0 0
      %507 = vmatprep.subr.bf16.mxu0 0
      %508 = vmatpush1.bf16.msra.mxu0 0
      %509 = vmatprep.subr.bf16.mxu0 0
      %510 = vmatpush1.bf16.msra.mxu0 0
      %511 = vmatprep.subr.bf16.mxu0 0
      %512 = vmatpush1.bf16.msra.mxu0 0
      %513 = vmatprep.subr.bf16.mxu0 0
      %514 = vmatpush1.bf16.msra.mxu0 0
      %515 = vmatprep.subr.bf16.mxu0 0
      %516 = vmatpush1.bf16.msra.mxu0 0
      %517 = vmatprep.subr.bf16.mxu0 0
      %518 = vmatpush1.bf16.msra.mxu0 0
      %519 = vmatprep.subr.bf16.mxu0 0
      %520 = vmatpush1.bf16.msra.mxu0 0
      %521 = vmatprep.subr.bf16.mxu0 0
      %522 = vmatpush1.bf16.msra.mxu0 0
      %523 = vmatprep.mubr.bf16.mxu0 0
      %524 = vmatmul.mubr.bf16.gmra.mrb[0].mxu0 %v489
      %v525 = vpop.f32.mrb[0].mxu0
      %v526 = vadd.f32 0.0, %v525
      %v527 = vpop.f32.mrb[0].mxu0
      %v528 = vpop.f32.mrb[0].mxu0
      %v529 = vpop.f32.mrb[0].mxu0
      %530 = vdwg.mxu0
      %v531 = vld [vmem:[%s3] sm:$0xf]
      %v532 = vld [vmem:[%s3 + $0x4] sm:$0xf]
      %v533 = vld [vmem:[%s3 + $0x8] sm:$0xf]
      %v534 = vld [vmem:[%s3 + $0xc] sm:$0xf]
      %v539 = vunpack.c.l.b16 %v531
      %v540 = vunpack.c.l.b16 %v532
      %v541 = vunpack.c.l.b16 %v533
      %v542 = vunpack.c.l.b16 %v534
      %v543 = vpack.c.b16 %v540, %v539
      %v544 = vpack.c.b16 %v542, %v541
      %v548 = vsel %vm487, %v468, 0
      %550 = vmatprep.subr.bf16.mxu0 0
      %551 = vmatpush1.bf16.msra.mxu0 %v543
      %552 = vmatprep.subr.bf16.mxu0 0
      %553 = vmatpush1.bf16.msra.mxu0 %v544
      %554 = vmatprep.subr.bf16.mxu0 0
      %555 = vmatpush1.bf16.msra.mxu0 0
      %556 = vmatprep.subr.bf16.mxu0 0
      %557 = vmatpush1.bf16.msra.mxu0 0
      %558 = vmatprep.subr.bf16.mxu0 0
      %559 = vmatpush1.bf16.msra.mxu0 0
      %560 = vmatprep.subr.bf16.mxu0 0
      %561 = vmatpush1.bf16.msra.mxu0 0
      %562 = vmatprep.subr.bf16.mxu0 0
      %563 = vmatpush1.bf16.msra.mxu0 0
      %564 = vmatprep.subr.bf16.mxu0 0
      %565 = vmatpush1.bf16.msra.mxu0 0
      %566 = vmatprep.subr.bf16.mxu0 0
      %567 = vmatpush1.bf16.msra.mxu0 0
      %568 = vmatprep.subr.bf16.mxu0 0
      %569 = vmatpush1.bf16.msra.mxu0 0
      %570 = vmatprep.subr.bf16.mxu0 0
      %571 = vmatpush1.bf16.msra.mxu0 0
      %572 = vmatprep.subr.bf16.mxu0 0
      %573 = vmatpush1.bf16.msra.mxu0 0
      %574 = vmatprep.subr.bf16.mxu0 0
      %575 = vmatpush1.bf16.msra.mxu0 0
      %576 = vmatprep.subr.bf16.mxu0 0
      %577 = vmatpush1.bf16.msra.mxu0 0
      %578 = vmatprep.subr.bf16.mxu0 0
      %579 = vmatpush1.bf16.msra.mxu0 0
      %580 = vmatprep.subr.bf16.mxu0 0
      %581 = vmatpush1.bf16.msra.mxu0 0
      %582 = vmatprep.mubr.bf16.mxu0 0
      %583 = vmatmul.mubr.bf16.gmra.mrb[0].mxu0 %v548
      %v584 = vpop.f32.mrb[0].mxu0
      %v585 = vadd.f32 0.0, %v584
      %v586 = vpop.f32.mrb[0].mxu0
      %v587 = vpop.f32.mrb[0].mxu0
      %v588 = vpop.f32.mrb[0].mxu0
      %589 = vdwg.mxu0
      %v590 = vld [vmem:[%s4] sm:$0xf]
      %v591 = vld [vmem:[%s4 + $0x4] sm:$0xf]
      %v592 = vld [vmem:[%s4 + $0x8] sm:$0xf]
      %v593 = vld [vmem:[%s4 + $0xc] sm:$0xf]
      %v598 = vunpack.c.l.b16 %v590
      %v599 = vunpack.c.l.b16 %v591
      %v600 = vunpack.c.l.b16 %v592
      %v601 = vunpack.c.l.b16 %v593
      %v602 = vpack.c.b16 %v599, %v598
      %v603 = vpack.c.b16 %v601, %v600
      %v607 = vsel %vm487, %v470, 0
      %609 = vmatprep.subr.bf16.mxu0 0
      %610 = vmatpush1.bf16.msra.mxu0 %v602
      %611 = vmatprep.subr.bf16.mxu0 0
      %612 = vmatpush1.bf16.msra.mxu0 %v603
      %613 = vmatprep.subr.bf16.mxu0 0
      %614 = vmatpush1.bf16.msra.mxu0 0
      %615 = vmatprep.subr.bf16.mxu0 0
      %616 = vmatpush1.bf16.msra.mxu0 0
      %617 = vmatprep.subr.bf16.mxu0 0
      %618 = vmatpush1.bf16.msra.mxu0 0
      %619 = vmatprep.subr.bf16.mxu0 0
      %620 = vmatpush1.bf16.msra.mxu0 0
      %621 = vmatprep.subr.bf16.mxu0 0
      %622 = vmatpush1.bf16.msra.mxu0 0
      %623 = vmatprep.subr.bf16.mxu0 0
      %624 = vmatpush1.bf16.msra.mxu0 0
      %625 = vmatprep.subr.bf16.mxu0 0
      %626 = vmatpush1.bf16.msra.mxu0 0
      %627 = vmatprep.subr.bf16.mxu0 0
      %628 = vmatpush1.bf16.msra.mxu0 0
      %629 = vmatprep.subr.bf16.mxu0 0
      %630 = vmatpush1.bf16.msra.mxu0 0
      %631 = vmatprep.subr.bf16.mxu0 0
      %632 = vmatpush1.bf16.msra.mxu0 0
      %633 = vmatprep.subr.bf16.mxu0 0
      %634 = vmatpush1.bf16.msra.mxu0 0
      %635 = vmatprep.subr.bf16.mxu0 0
      %636 = vmatpush1.bf16.msra.mxu0 0
      %637 = vmatprep.subr.bf16.mxu0 0
      %638 = vmatpush1.bf16.msra.mxu0 0
      %639 = vmatprep.subr.bf16.mxu0 0
      %640 = vmatpush1.bf16.msra.mxu0 0
      %641 = vmatprep.mubr.bf16.mxu0 0
      %642 = vmatmul.mubr.bf16.gmra.mrb[0].mxu0 %v607
      %v643 = vpop.f32.mrb[0].mxu0
      %v644 = vadd.f32 0.0, %v643
      %v645 = vpop.f32.mrb[0].mxu0
      %v646 = vpop.f32.mrb[0].mxu0
      %v647 = vpop.f32.mrb[0].mxu0
      %648 = vdwg.mxu0
      %v649 = vsub.f32 %v526, %v585
      %v650 = vld [vmem:[%s5] sm:$0x1]
      %v652 = vlaneseq
      %v653 = vshrl.u32 %v652, 7
      %v654 = vsub.s32 0, %v653
      %v655 = vrot.slane %v650, %v654
      %v657 = vadd.f32 %v649, %v655
      %v658 = vsub.f32 %v644, %v526
      %v659 = vsub.f32 %v658, %v585
      %v660 = vld [vmem:[%s6] sm:$0x1]
      %v662 = vlaneseq
      %v663 = vshrl.u32 %v662, 7
      %v664 = vsub.s32 0, %v663
      %v665 = vrot.slane %v660, %v664
      %v667 = vadd.f32 %v659, %v665
      %v668 = vmul.f32 %v657, 0.5
      %v669 = vmul.f32 %v657, 0.044715
      %v670 = vmul.f32 %v669, %v657
      %v671 = vmul.f32 %v670, %v657
      %v672 = vadd.f32 %v657, %v671
      %v673 = vmul.f32 %v672, 0.7978846
      %v674 = vtanh.pop %v673
      %v675 = vadd.f32 %v674, 1.0
      %v676 = vmul.f32 %v668, %v675
      %v677 = vmul.f32 %v667, 0.5
      %v678 = vmul.f32 %v667, 0.044715
      %v679 = vmul.f32 %v678, %v667
      %v680 = vmul.f32 %v679, %v667
      %v681 = vadd.f32 %v667, %v680
      %v682 = vmul.f32 %v681, 0.7978846
      %v683 = vtanh.pop %v682
      %v684 = vadd.f32 %v683, 1.0
      %v685 = vmul.f32 %v677, %v684
      %v686 = vpack.c.bf16 %v676, %v676
      %v687 = vpack.c.bf16 %v685, %v685
      %v688 = vadd.f32 %v676, %v685
      %v689 = vpack.c.bf16 %v688, %v688
      %v690 = vld [vmem:[%s7] sm:$0xf]
      %v691 = vld [vmem:[%s7 + $0x4] sm:$0xf]
      %v692 = vld [vmem:[%s7 + $0x8] sm:$0xf]
      %v693 = vld [vmem:[%s7 + $0xc] sm:$0xf]
      %v694 = vld [vmem:[%s7 + $0x10] sm:$0xf]
      %v695 = vld [vmem:[%s7 + $0x14] sm:$0xf]
      %v696 = vld [vmem:[%s7 + $0x18] sm:$0xf]
      %v697 = vld [vmem:[%s7 + $0x1c] sm:$0xf]
      %v706 = vunpack.c.l.b16 %v690
      %v707 = vunpack.c.l.b16 %v691
      %v708 = vunpack.c.l.b16 %v692
      %v709 = vunpack.c.l.b16 %v693
      %v710 = vunpack.c.l.b16 %v694
      %v711 = vunpack.c.l.b16 %v695
      %v712 = vunpack.c.l.b16 %v696
      %v713 = vunpack.c.l.b16 %v697
      %v714 = vpack.c.b16 %v707, %v706
      %v715 = vpack.c.b16 %v709, %v708
      %v716 = vpack.c.b16 %v711, %v710
      %v717 = vpack.c.b16 %v713, %v712
      %vm722 = vcmask 523264
      %v724 = vsel %vm722, %v686, 0
      %726 = vmatprep.subr.bf16.mxu0 0
      %727 = vmatpush1.bf16.msra.mxu0 %v714
      %728 = vmatprep.subr.bf16.mxu0 0
      %729 = vmatpush1.bf16.msra.mxu0 %v715
      %730 = vmatprep.subr.bf16.mxu0 0
      %731 = vmatpush1.bf16.msra.mxu0 %v716
      %732 = vmatprep.subr.bf16.mxu0 0
      %733 = vmatpush1.bf16.msra.mxu0 %v717
      %734 = vmatprep.subr.bf16.mxu0 0
      %735 = vmatpush1.bf16.msra.mxu0 0
      %736 = vmatprep.subr.bf16.mxu0 0
      %737 = vmatpush1.bf16.msra.mxu0 0
      %738 = vmatprep.subr.bf16.mxu0 0
      %739 = vmatpush1.bf16.msra.mxu0 0
      %740 = vmatprep.subr.bf16.mxu0 0
      %741 = vmatpush1.bf16.msra.mxu0 0
      %742 = vmatprep.subr.bf16.mxu0 0
      %743 = vmatpush1.bf16.msra.mxu0 0
      %744 = vmatprep.subr.bf16.mxu0 0
      %745 = vmatpush1.bf16.msra.mxu0 0
      %746 = vmatprep.subr.bf16.mxu0 0
      %747 = vmatpush1.bf16.msra.mxu0 0
      %748 = vmatprep.subr.bf16.mxu0 0
      %749 = vmatpush1.bf16.msra.mxu0 0
      %750 = vmatprep.subr.bf16.mxu0 0
      %751 = vmatpush1.bf16.msra.mxu0 0
      %752 = vmatprep.subr.bf16.mxu0 0
      %753 = vmatpush1.bf16.msra.mxu0 0
      %754 = vmatprep.subr.bf16.mxu0 0
      %755 = vmatpush1.bf16.msra.mxu0 0
      %756 = vmatprep.subr.bf16.mxu0 0
      %757 = vmatpush1.bf16.msra.mxu0 0
      %758 = vmatprep.mubr.bf16.mxu0 0
      %759 = vmatmul.mubr.bf16.gmra.mrb[0].mxu0 %v724
      %v760 = vpop.f32.mrb[0].mxu0
      %v761 = vadd.f32 0.0, %v760
      %v762 = vpop.f32.mrb[0].mxu0
      %v763 = vpop.f32.mrb[0].mxu0
      %v764 = vpop.f32.mrb[0].mxu0
      %765 = vdwg.mxu0
      %v766 = vld [vmem:[%s8] sm:$0xf]
      %v767 = vld [vmem:[%s8 + $0x4] sm:$0xf]
      %v768 = vld [vmem:[%s8 + $0x8] sm:$0xf]
      %v769 = vld [vmem:[%s8 + $0xc] sm:$0xf]
      %v770 = vld [vmem:[%s8 + $0x10] sm:$0xf]
      %v771 = vld [vmem:[%s8 + $0x14] sm:$0xf]
      %v772 = vld [vmem:[%s8 + $0x18] sm:$0xf]
      %v773 = vld [vmem:[%s8 + $0x1c] sm:$0xf]
      %v782 = vunpack.c.l.b16 %v766
      %v783 = vunpack.c.l.b16 %v767
      %v784 = vunpack.c.l.b16 %v768
      %v785 = vunpack.c.l.b16 %v769
      %v786 = vunpack.c.l.b16 %v770
      %v787 = vunpack.c.l.b16 %v771
      %v788 = vunpack.c.l.b16 %v772
      %v789 = vunpack.c.l.b16 %v773
      %v790 = vpack.c.b16 %v783, %v782
      %v791 = vpack.c.b16 %v785, %v784
      %v792 = vpack.c.b16 %v787, %v786
      %v793 = vpack.c.b16 %v789, %v788
      %v799 = vsel %vm722, %v687, 0
      %801 = vmatprep.subr.bf16.mxu0 0
      %802 = vmatpush1.bf16.msra.mxu0 %v790
      %803 = vmatprep.subr.bf16.mxu0 0
      %804 = vmatpush1.bf16.msra.mxu0 %v791
      %805 = vmatprep.subr.bf16.mxu0 0
      %806 = vmatpush1.bf16.msra.mxu0 %v792
      %807 = vmatprep.subr.bf16.mxu0 0
      %808 = vmatpush1.bf16.msra.mxu0 %v793
      %809 = vmatprep.subr.bf16.mxu0 0
      %810 = vmatpush1.bf16.msra.mxu0 0
      %811 = vmatprep.subr.bf16.mxu0 0
      %812 = vmatpush1.bf16.msra.mxu0 0
      %813 = vmatprep.subr.bf16.mxu0 0
      %814 = vmatpush1.bf16.msra.mxu0 0
      %815 = vmatprep.subr.bf16.mxu0 0
      %816 = vmatpush1.bf16.msra.mxu0 0
      %817 = vmatprep.subr.bf16.mxu0 0
      %818 = vmatpush1.bf16.msra.mxu0 0
      %819 = vmatprep.subr.bf16.mxu0 0
      %820 = vmatpush1.bf16.msra.mxu0 0
      %821 = vmatprep.subr.bf16.mxu0 0
      %822 = vmatpush1.bf16.msra.mxu0 0
      %823 = vmatprep.subr.bf16.mxu0 0
      %824 = vmatpush1.bf16.msra.mxu0 0
      %825 = vmatprep.subr.bf16.mxu0 0
      %826 = vmatpush1.bf16.msra.mxu0 0
      %827 = vmatprep.subr.bf16.mxu0 0
      %828 = vmatpush1.bf16.msra.mxu0 0
      %829 = vmatprep.subr.bf16.mxu0 0
      %830 = vmatpush1.bf16.msra.mxu0 0
      %831 = vmatprep.subr.bf16.mxu0 0
      %832 = vmatpush1.bf16.msra.mxu0 0
      %833 = vmatprep.mubr.bf16.mxu0 0
      %834 = vmatmul.mubr.bf16.gmra.mrb[0].mxu0 %v799
      %v835 = vpop.f32.mrb[0].mxu0
      %v836 = vadd.f32 0.0, %v835
      %v837 = vpop.f32.mrb[0].mxu0
      %v838 = vpop.f32.mrb[0].mxu0
      %v839 = vpop.f32.mrb[0].mxu0
      %840 = vdwg.mxu0
      %v841 = vld [vmem:[%s9] sm:$0xf]
      %v842 = vld [vmem:[%s9 + $0x4] sm:$0xf]
      %v843 = vld [vmem:[%s9 + $0x8] sm:$0xf]
      %v844 = vld [vmem:[%s9 + $0xc] sm:$0xf]
      %v845 = vld [vmem:[%s9 + $0x10] sm:$0xf]
      %v846 = vld [vmem:[%s9 + $0x14] sm:$0xf]
      %v847 = vld [vmem:[%s9 + $0x18] sm:$0xf]
      %v848 = vld [vmem:[%s9 + $0x1c] sm:$0xf]
      %v857 = vunpack.c.l.b16 %v841
      %v858 = vunpack.c.l.b16 %v842
      %v859 = vunpack.c.l.b16 %v843
      %v860 = vunpack.c.l.b16 %v844
      %v861 = vunpack.c.l.b16 %v845
      %v862 = vunpack.c.l.b16 %v846
      %v863 = vunpack.c.l.b16 %v847
      %v864 = vunpack.c.l.b16 %v848
      %v865 = vpack.c.b16 %v858, %v857
      %v866 = vpack.c.b16 %v860, %v859
      %v867 = vpack.c.b16 %v862, %v861
      %v868 = vpack.c.b16 %v864, %v863
      %v874 = vsel %vm722, %v689, 0
      %876 = vmatprep.subr.bf16.mxu0 0
      %877 = vmatpush1.bf16.msra.mxu0 %v865
      %878 = vmatprep.subr.bf16.mxu0 0
      %879 = vmatpush1.bf16.msra.mxu0 %v866
      %880 = vmatprep.subr.bf16.mxu0 0
      %881 = vmatpush1.bf16.msra.mxu0 %v867
      %882 = vmatprep.subr.bf16.mxu0 0
      %883 = vmatpush1.bf16.msra.mxu0 %v868
      %884 = vmatprep.subr.bf16.mxu0 0
      %885 = vmatpush1.bf16.msra.mxu0 0
      %886 = vmatprep.subr.bf16.mxu0 0
      %887 = vmatpush1.bf16.msra.mxu0 0
      %888 = vmatprep.subr.bf16.mxu0 0
      %889 = vmatpush1.bf16.msra.mxu0 0
      %890 = vmatprep.subr.bf16.mxu0 0
      %891 = vmatpush1.bf16.msra.mxu0 0
      %892 = vmatprep.subr.bf16.mxu0 0
      %893 = vmatpush1.bf16.msra.mxu0 0
      %894 = vmatprep.subr.bf16.mxu0 0
      %895 = vmatpush1.bf16.msra.mxu0 0
      %896 = vmatprep.subr.bf16.mxu0 0
      %897 = vmatpush1.bf16.msra.mxu0 0
      %898 = vmatprep.subr.bf16.mxu0 0
      %899 = vmatpush1.bf16.msra.mxu0 0
      %900 = vmatprep.subr.bf16.mxu0 0
      %901 = vmatpush1.bf16.msra.mxu0 0
      %902 = vmatprep.subr.bf16.mxu0 0
      %903 = vmatpush1.bf16.msra.mxu0 0
      %904 = vmatprep.subr.bf16.mxu0 0
      %905 = vmatpush1.bf16.msra.mxu0 0
      %906 = vmatprep.subr.bf16.mxu0 0
      %907 = vmatpush1.bf16.msra.mxu0 0
      %908 = vmatprep.mubr.bf16.mxu0 0
      %909 = vmatmul.mubr.bf16.gmra.mrb[0].mxu0 %v874
      %v910 = vpop.f32.mrb[0].mxu0
      %v911 = vadd.f32 0.0, %v910
      %v912 = vpop.f32.mrb[0].mxu0
      %v913 = vpop.f32.mrb[0].mxu0
      %v914 = vpop.f32.mrb[0].mxu0
      %915 = vdwg.mxu0
      %v916 = vsub.f32 %v761, %v836
      %v917 = vld [vmem:[%s10] sm:$0x1]
      %v919 = vlaneseq
      %v920 = vshrl.u32 %v919, 7
      %v921 = vsub.s32 0, %v920
      %v922 = vrot.slane %v917, %v921
      %v924 = vadd.f32 %v916, %v922
      %v925 = vadd.f32 %v924, %v465
      %926 = vst.msk [vmem:[%s459] sm:$0xff] %vm487, %v925
      %v927 = vsub.f32 %v911, %v761
      %v928 = vsub.f32 %v927, %v836
      %v929 = vld [vmem:[%s11] sm:$0x1]
      %v931 = vlaneseq
      %v932 = vshrl.u32 %v931, 7
      %v933 = vsub.s32 0, %v932
      %v934 = vrot.slane %v929, %v933
      %v936 = vadd.f32 %v928, %v934
      %v937 = vadd.f32 %v936, %v466
      %938 = vst.msk [vmem:[%s463] sm:$0xff] %vm487, %v937
      %p939 = scmp.lt.s32.totalorder %s25, 1
      %s940 = scalar_select %p939, %s25, 1
      %s941 = smul.addr %s940, 8
      %s942 = scalar_lea.vmem %s12, %s941
      %p943 = scmp.lt.s32.totalorder %s25, 1
      %s944 = scalar_select %p943, %s25, 1
      %s945 = smul.addr %s944, 8
      %s946 = scalar_lea.vmem %s13, %s945
      // Predicated region
      $region69: #{tst_encoder_forward.7} parent=67 // pred_check
        %p947 = pneg %p305
      $region70: #{tst_encoder_forward.7} parent=67 // pred_check_branch
        %949 = sbr.rel (%p947) target = $region72
      $region71: #{tst_encoder_forward.7} parent=67 // pred_region
        _
      $region72: #{tst_encoder_forward.7} parent=67 // pred_fallthru
        _
      // Predicated region
      $region73: #{tst_encoder_forward.7} parent=67 // pred_check
        %p950 = pneg %p331
      $region74: #{tst_encoder_forward.7} parent=67 // pred_check_branch
        %952 = sbr.rel (%p950) target = $region76
      $region75: #{tst_encoder_forward.7} parent=67 // pred_region
        _
      $region76: #{tst_encoder_forward.7} parent=67 // pred_fallthru
        _
    $region68: #{tst_encoder_forward.7} parent=5 // pred_fallthru
      _
    %p953 = scmp.le.s32.totalorder 2, %s20
    // Predicated region
    $region77: #{tst_encoder_forward.7} parent=5 // pred_check
      %p954 = pneg %p953
    $region78: #{tst_encoder_forward.7} parent=5 // pred_check_branch
      %956 = sbr.rel (%p954) target = $region80
    $region79: #{tst_encoder_forward.7} parent=5 // pred_region
      %s957 = ssub.s32 %s20, 2
      // Predicated region
      $region81: #{tst_encoder_forward.7} parent=79 // pred_check
        %p958 = pneg %p311
      $region82: #{tst_encoder_forward.7} parent=79 // pred_check_branch
        %960 = sbr.rel (%p958) target = $region84
      $region83: #{tst_encoder_forward.7} parent=79 // pred_region
        %p961 = scmp.lt.s32.totalorder %s26, 1
        %s962 = scalar_select %p961, %s26, 1
        %s963 = smul.addr %s962, 8
        %s964 = scalar_lea.vmem %s12, %s963
      $region84: #{tst_encoder_forward.7} parent=79 // pred_fallthru
        _
      // Predicated region
      $region85: #{tst_encoder_forward.7} parent=79 // pred_check
        %p965 = pneg %p337
      $region86: #{tst_encoder_forward.7} parent=79 // pred_check_branch
        %967 = sbr.rel (%p965) target = $region88
      $region87: #{tst_encoder_forward.7} parent=79 // pred_region
        %p968 = scmp.lt.s32.totalorder %s26, 1
        %s969 = scalar_select %p968, %s26, 1
        %s970 = smul.addr %s969, 8
        %s971 = scalar_lea.vmem %s13, %s970
      $region88: #{tst_encoder_forward.7} parent=79 // pred_fallthru
        _
    $region80: #{tst_encoder_forward.7} parent=5 // pred_fallthru
      _
  $region6: #{tst_encoder_forward.7} parent=0 // loop_footer
    %s24 = sadd.s32 1, %s20
  $region7: #{tst_encoder_forward.7} parent=0 // loop_footer_branch
    %19 = sbr.rel target = $region3
  $region8: #{tst_encoder_forward.7} parent=0 // loop_exit
    _

</llo_original>
